<compile_context>
chip_gen: v7x
topology: tpu7x:2x2x1
jax: 0.10.0
libtpu: 0.0.40
codegen_flags: <defaults>
</compile_context>

<pallas_src>
import functools

import jax
import jax.numpy as jnp
from jax.experimental import pallas as pl
from jax.experimental.pallas import tpu as pltpu


def _round_up(x, m):
    return (x + m - 1) // m * m


def _mubo_kernel(zs_ref, zt_ref, zts_ref,
                 w1x_ref, w1y_ref, b1_ref, w2r_ref, b2_ref,
                 out_ref, acc_ref, *, b_true, rem):
    pid = pl.program_id(0)
    last = pl.num_programs(0) - 1

    @pl.when(pid == 0)
    def _init():
        acc_ref[0] = 0.0
        acc_ref[1] = 0.0

    # Shared critic term: zs @ W1x (reused by both critic evaluations).
    hx = jnp.dot(zs_ref[...], w1x_ref[...],
                 preferred_element_type=jnp.float32)                    # (TB, H)
    # Two small MXU passes against the resident (y_dim, H) RHS -- no concat.
    hy_t = jnp.dot(zt_ref[...], w1y_ref[...],
                   preferred_element_type=jnp.float32)                  # (TB, H)
    hy_s = jnp.dot(zts_ref[...], w1y_ref[...],
                   preferred_element_type=jnp.float32)                  # (TB, H)

    b1 = b1_ref[...]
    w2r = w2r_ref[...]
    b2 = b2_ref[...]

    h_t = jnp.maximum(hx + hy_t + b1, 0.0)
    h_s = jnp.maximum(hx + hy_s + b1, 0.0)

    # N=1 output matmul as VPU multiply + lane (XLU) reduction.
    logit_t = jnp.sum(h_t * w2r, axis=-1, keepdims=True) + b2           # (TB, 1)
    logit_s = jnp.sum(h_s * w2r, axis=-1, keepdims=True) + b2           # (TB, 1)
    mubo = jax.nn.sigmoid(logit_t) - jax.nn.sigmoid(logit_s)            # (TB, 1)

    def accumulate(m):
        neg = jnp.minimum(m, 0.0)           # == mubo * pos_mask
        acc_ref[0] = acc_ref[0] + jnp.sum(m)
        acc_ref[1] = acc_ref[1] + jnp.sum(neg * neg)

    if rem != 0:
        # Full tiles: no masking work at all.
        @pl.when(pid < last)
        def _acc_full():
            accumulate(mubo)

        # Last (partial) tile: select against the true batch size so the
        # undefined tail of the block is discarded (select, not multiply).
        @pl.when(pid == last)
        def _acc_tail():
            row = jax.lax.broadcasted_iota(jnp.int32, mubo.shape, 0)
            accumulate(jnp.where(row < rem, mubo, 0.0))
    else:
        accumulate(mubo)

    @pl.when(pid == last)
    def _finalize():
        # mubo.mean() + reg  ==  (sum(mubo) + sum(min(mubo,0)^2)) / B
        out_ref[0, 0] = (acc_ref[0] + acc_ref[1]) * (1.0 / float(b_true))


def calculate_mubo_pallas(zs, zt, zt_shuffle, params, *, tb=4096):
    """params = (w1x, w1y, b1, w2, b2); returns a scalar f32."""
    w1x, w1y, b1, w2, b2 = params
    b_true, x_dim = zs.shape
    y_dim = zt.shape[1]
    hid = w1x.shape[1]

    # Batch tile: multiple of 8 sublanes, capped by the (rounded-up) batch.
    tb = min(_round_up(tb, 8), _round_up(b_true, 8))
    grid = (pl.cdiv(b_true, tb),)
    rem = b_true % tb

    w2r = w2.reshape(1, hid)              # (1, H) row for the VPU reduce

    def tile_spec(d):
        return pl.BlockSpec((tb, d), lambda i: (i, 0))

    def const_spec(shape):
        return pl.BlockSpec(shape, lambda i: (0, 0))

    kernel = functools.partial(_mubo_kernel, b_true=b_true, rem=rem)
    out = pl.pallas_call(
        kernel,
        out_shape=jax.ShapeDtypeStruct((1, 1), jnp.float32),
        grid=grid,
        in_specs=[
            tile_spec(x_dim), tile_spec(y_dim), tile_spec(y_dim),
            const_spec(w1x.shape), const_spec(w1y.shape),
            const_spec(b1.shape), const_spec(w2r.shape), const_spec(b2.shape),
        ],
        out_specs=pl.BlockSpec(memory_space=pltpu.MemorySpace.SMEM),
        scratch_shapes=[pltpu.SMEM((2,), jnp.float32)],
        compiler_params=pltpu.CompilerParams(
            dimension_semantics=("arbitrary",)),
    )(zs, zt, zt_shuffle, w1x, w1y, b1, w2r, b2)
    return out[0, 0]


def calculate_mubo_ref(zs, zt, zt_shuffle, params):
    """Pure-JAX reference mirroring the PyTorch forward."""
    w1x, w1y, b1, w2, b2 = params
    w1 = jnp.concatenate([w1x, w1y], axis=0)

    def critic(a, b):
        cat = jnp.concatenate([a, b], axis=-1)
        h = jnp.maximum(cat @ w1 + b1, 0.0)
        return jax.nn.sigmoid(h @ w2 + b2)

    f_st = critic(zs, zt)
    f_s_t = critic(zs, zt_shuffle)
    mubo = f_st - f_s_t
    pos_mask = jnp.where(mubo < 0.0, 1.0, 0.0)
    reg = jnp.mean((mubo * pos_mask) ** 2)
    return jnp.mean(mubo) + reg


if __name__ == "__main__":
    key = jax.random.PRNGKey(0)
    B, D_IN, X_DIM, Y_DIM = 200, 24, 32, 32
    CAT_DIM = X_DIM + Y_DIM
    HID = CAT_DIM // 4

    k_x, k_ps, k_pt, k_w1, k_b1, k_w2, k_b2, k_perm = jax.random.split(key, 8)

    # --- inputs -------------------------------------------------------------
    x_his = jax.random.normal(k_x, (B, D_IN), dtype=jnp.float32)

    # TODO(synk): var_net_t / var_net_s are external modules passed at call
    # time in the PyTorch code; modeled here as deterministic tanh-linear maps
    # (plain-JAX glue producing zs / zt for the kernel).
    proj_s = 0.1 * jax.random.normal(k_ps, (D_IN, X_DIM), dtype=jnp.float32)
    proj_t = 0.1 * jax.random.normal(k_pt, (D_IN, Y_DIM), dtype=jnp.float32)
    zs = jnp.tanh(x_his @ proj_s)   # var_net_s(x_his)
    zt = jnp.tanh(x_his @ proj_t)   # var_net_t(x_his)

    # torch.randperm(zt.shape[0]); zt[idx]  -> row permutation (JAX glue)
    perm = jax.random.permutation(k_perm, B)
    zt_shuffle = zt[perm]

    # --- critic parameters (deterministic init, Linear weights as (in, out)) -
    w1 = 0.1 * jax.random.normal(k_w1, (CAT_DIM, HID), dtype=jnp.float32)
    b1 = 0.1 * jax.random.normal(k_b1, (1, HID), dtype=jnp.float32)
    w2 = 0.1 * jax.random.normal(k_w2, (HID, 1), dtype=jnp.float32)
    b2 = 0.1 * jax.random.normal(k_b2, (1, 1), dtype=jnp.float32)
    params = (w1[:X_DIM], w1[X_DIM:], b1, w2, b2)

    ref = calculate_mubo_ref(zs, zt, zt_shuffle, params)

    # Default (single big tile, partial block masked against true B).
    out_big = jax.block_until_ready(
        calculate_mubo_pallas(zs, zt, zt_shuffle, params))
    assert jnp.allclose(out_big, ref, atol=1e-5, rtol=1e-5), (out_big, ref)

    # tb=64 exercises a multi-tile grid with a remainder tile (200 = 3*64 + 8).
    out_small = jax.block_until_ready(
        calculate_mubo_pallas(zs, zt, zt_shuffle, params, tb=64))
    assert jnp.allclose(out_small, ref, atol=1e-5, rtol=1e-5), (out_small, ref)

    print("KERNEL_OK")
</pallas_src>

<mosaic_0001>
module attributes {stable_mosaic.version = 11 : i64} {
  func.func @_mubo_kernel(%arg0: i32, %arg1: memref<200x32xf32, #tpu.memory_space<vmem>>, %arg2: memref<200x32xf32, #tpu.memory_space<vmem>>, %arg3: memref<200x32xf32, #tpu.memory_space<vmem>>, %arg4: memref<32x16xf32, #tpu.memory_space<vmem>>, %arg5: memref<32x16xf32, #tpu.memory_space<vmem>>, %arg6: memref<1x16xf32, #tpu.memory_space<vmem>>, %arg7: memref<1x16xf32, #tpu.memory_space<vmem>>, %arg8: memref<1x1xf32, #tpu.memory_space<vmem>>, %arg9: memref<1x1xf32, #tpu.memory_space<smem>>, %arg10: memref<2xf32, #tpu.memory_space<smem>>) attributes {dimension_semantics = [#tpu.dimension_semantics<arbitrary>], iteration_bounds = array<i64: 1>, scalar_prefetch = 0 : i64, scratch_operands = 1 : i64, tpu.core_type = #tpu.core_type<tc>, window_params = [{transform_indices = @transform_0, window_bounds = array<i64: 200, 32>}, {transform_indices = @transform_1, window_bounds = array<i64: 200, 32>}, {transform_indices = @transform_2, window_bounds = array<i64: 200, 32>}, {pipeline_mode = #tpu.pipeline_mode<synchronous>, transform_indices = @transform_3, window_bounds = array<i64: 32, 16>}, {pipeline_mode = #tpu.pipeline_mode<synchronous>, transform_indices = @transform_4, window_bounds = array<i64: 32, 16>}, {pipeline_mode = #tpu.pipeline_mode<synchronous>, transform_indices = @transform_5, window_bounds = array<i64: 1, 16>}, {pipeline_mode = #tpu.pipeline_mode<synchronous>, transform_indices = @transform_6, window_bounds = array<i64: 1, 16>}, {pipeline_mode = #tpu.pipeline_mode<synchronous>, transform_indices = @transform_7, window_bounds = array<i64: 1, 1>}, {transform_indices = @transform_8, window_bounds = array<i64: 1, 1>}]} {
    %c0_i32 = arith.constant 0 : i32
    %0 = arith.cmpi eq, %arg0, %c0_i32 : i32
    %1 = arith.extui %0 : i1 to i32
    %c0_i32_0 = arith.constant 0 : i32
    %2 = arith.cmpi ne, %1, %c0_i32_0 : i32
    scf.if %2 {
      %cst_34 = arith.constant 0.000000e+00 : f32
      %c0_35 = arith.constant 0 : index
      %68 = memref.load %arg10[%c0_35] : memref<2xf32, #tpu.memory_space<smem>>
      memref.store %cst_34, %arg10[%c0_35] : memref<2xf32, #tpu.memory_space<smem>>
      %cst_36 = arith.constant 0.000000e+00 : f32
      %c1_37 = arith.constant 1 : index
      %69 = memref.load %arg10[%c1_37] : memref<2xf32, #tpu.memory_space<smem>>
      memref.store %cst_36, %arg10[%c1_37] : memref<2xf32, #tpu.memory_space<smem>>
    } else {
    }
    %c0 = arith.constant 0 : index
    %c0_1 = arith.constant 0 : index
    %3 = vector.load %arg1[%c0, %c0_1] : memref<200x32xf32, #tpu.memory_space<vmem>>, vector<200x32xf32>
    %c0_2 = arith.constant 0 : index
    %c0_3 = arith.constant 0 : index
    %4 = vector.load %arg4[%c0_2, %c0_3] : memref<32x16xf32, #tpu.memory_space<vmem>>, vector<32x16xf32>
    %cst = arith.constant dense<0.000000e+00> : vector<200x16xf32>
    %5 = tpu.matmul %3, %4, %cst {dimension_numbers = #tpu.dot_dimension_numbers<[1], [0], [0], [1], [0, 0, 1, 1], [], []>} : vector<200x32xf32>, vector<32x16xf32>, vector<200x16xf32> -> vector<200x16xf32>
    %c0_4 = arith.constant 0 : index
    %c0_5 = arith.constant 0 : index
    %6 = vector.load %arg2[%c0_4, %c0_5] : memref<200x32xf32, #tpu.memory_space<vmem>>, vector<200x32xf32>
    %c0_6 = arith.constant 0 : index
    %c0_7 = arith.constant 0 : index
    %7 = vector.load %arg5[%c0_6, %c0_7] : memref<32x16xf32, #tpu.memory_space<vmem>>, vector<32x16xf32>
    %cst_8 = arith.constant dense<0.000000e+00> : vector<200x16xf32>
    %8 = tpu.matmul %6, %7, %cst_8 {dimension_numbers = #tpu.dot_dimension_numbers<[1], [0], [0], [1], [0, 0, 1, 1], [], []>} : vector<200x32xf32>, vector<32x16xf32>, vector<200x16xf32> -> vector<200x16xf32>
    %c0_9 = arith.constant 0 : index
    %c0_10 = arith.constant 0 : index
    %9 = vector.load %arg3[%c0_9, %c0_10] : memref<200x32xf32, #tpu.memory_space<vmem>>, vector<200x32xf32>
    %c0_11 = arith.constant 0 : index
    %c0_12 = arith.constant 0 : index
    %10 = vector.load %arg5[%c0_11, %c0_12] : memref<32x16xf32, #tpu.memory_space<vmem>>, vector<32x16xf32>
    %cst_13 = arith.constant dense<0.000000e+00> : vector<200x16xf32>
    %11 = tpu.matmul %9, %10, %cst_13 {dimension_numbers = #tpu.dot_dimension_numbers<[1], [0], [0], [1], [0, 0, 1, 1], [], []>} : vector<200x32xf32>, vector<32x16xf32>, vector<200x16xf32> -> vector<200x16xf32>
    %c0_14 = arith.constant 0 : index
    %c0_15 = arith.constant 0 : index
    %12 = vector.load %arg6[%c0_14, %c0_15] : memref<1x16xf32, #tpu.memory_space<vmem>>, vector<1x16xf32>
    %c0_16 = arith.constant 0 : index
    %c0_17 = arith.constant 0 : index
    %13 = vector.load %arg7[%c0_16, %c0_17] : memref<1x16xf32, #tpu.memory_space<vmem>>, vector<1x16xf32>
    %c0_18 = arith.constant 0 : index
    %c0_19 = arith.constant 0 : index
    %14 = vector.load %arg8[%c0_18, %c0_19] : memref<1x1xf32, #tpu.memory_space<vmem>>, vector<1x1xf32>
    %15 = arith.addf %5, %8 : vector<200x16xf32>
    %16 = vector.broadcast %12 : vector<1x16xf32> to vector<200x16xf32>
    %17 = arith.addf %15, %16 : vector<200x16xf32>
    %cst_20 = arith.constant 0.000000e+00 : f32
    %18 = vector.broadcast %cst_20 : f32 to vector<200x16xf32>
    %19 = arith.maximumf %17, %18 : vector<200x16xf32>
    %20 = arith.addf %5, %11 : vector<200x16xf32>
    %21 = vector.broadcast %12 : vector<1x16xf32> to vector<200x16xf32>
    %22 = arith.addf %20, %21 : vector<200x16xf32>
    %cst_21 = arith.constant 0.000000e+00 : f32
    %23 = vector.broadcast %cst_21 : f32 to vector<200x16xf32>
    %24 = arith.maximumf %22, %23 : vector<200x16xf32>
    %25 = vector.broadcast %13 : vector<1x16xf32> to vector<200x16xf32>
    %26 = arith.mulf %19, %25 : vector<200x16xf32>
    %cst_22 = arith.constant dense<0.000000e+00> : vector<200xf32>
    %27 = vector.multi_reduction <add>, %26, %cst_22 [1] : vector<200x16xf32> to vector<200xf32>
    %28 = vector.shape_cast %27 : vector<200xf32> to vector<200x1xf32>
    %29 = vector.broadcast %14 : vector<1x1xf32> to vector<200x1xf32>
    %30 = arith.addf %28, %29 : vector<200x1xf32>
    %31 = vector.broadcast %13 : vector<1x16xf32> to vector<200x16xf32>
    %32 = arith.mulf %24, %31 : vector<200x16xf32>
    %cst_23 = arith.constant dense<0.000000e+00> : vector<200xf32>
    %33 = vector.multi_reduction <add>, %32, %cst_23 [1] : vector<200x16xf32> to vector<200xf32>
    %34 = vector.shape_cast %33 : vector<200xf32> to vector<200x1xf32>
    %35 = vector.broadcast %14 : vector<1x1xf32> to vector<200x1xf32>
    %36 = arith.addf %34, %35 : vector<200x1xf32>
    %37 = arith.negf %30 : vector<200x1xf32>
    %38 = math.exp %37 : vector<200x1xf32>
    %cst_24 = arith.constant 1.000000e+00 : f32
    %39 = vector.broadcast %cst_24 : f32 to vector<200x1xf32>
    %40 = arith.addf %39, %38 : vector<200x1xf32>
    %41 = arith.divf %39, %40 : vector<200x1xf32>
    %42 = arith.negf %36 : vector<200x1xf32>
    %43 = math.exp %42 : vector<200x1xf32>
    %cst_25 = arith.constant 1.000000e+00 : f32
    %44 = vector.broadcast %cst_25 : f32 to vector<200x1xf32>
    %45 = arith.addf %44, %43 : vector<200x1xf32>
    %46 = arith.divf %44, %45 : vector<200x1xf32>
    %47 = arith.subf %41, %46 : vector<200x1xf32>
    %cst_26 = arith.constant 0.000000e+00 : f32
    %48 = vector.broadcast %cst_26 : f32 to vector<200x1xf32>
    %49 = arith.minimumf %47, %48 : vector<200x1xf32>
    %c0_27 = arith.constant 0 : index
    %50 = memref.load %arg10[%c0_27] : memref<2xf32, #tpu.memory_space<smem>>
    %51 = vector.shape_cast %47 : vector<200x1xf32> to vector<1x200x1xf32>
    %cst_28 = arith.constant dense<0.000000e+00> : vector<1xf32>
    %52 = vector.multi_reduction <add>, %51, %cst_28 [1, 2] : vector<1x200x1xf32> to vector<1xf32>
    %53 = vector.shape_cast %52 : vector<1xf32> to vector<1x1x1xf32>
    %54 = vector.extract %53[0, 0, 0] : f32 from vector<1x1x1xf32>
    %55 = arith.addf %50, %54 : f32
    %c0_29 = arith.constant 0 : index
    %56 = memref.load %arg10[%c0_29] : memref<2xf32, #tpu.memory_space<smem>>
    memref.store %55, %arg10[%c0_29] : memref<2xf32, #tpu.memory_space<smem>>
    %c1 = arith.constant 1 : index
    %57 = memref.load %arg10[%c1] : memref<2xf32, #tpu.memory_space<smem>>
    %58 = arith.mulf %49, %49 : vector<200x1xf32>
    %59 = vector.shape_cast %58 : vector<200x1xf32> to vector<1x200x1xf32>
    %cst_30 = arith.constant dense<0.000000e+00> : vector<1xf32>
    %60 = vector.multi_reduction <add>, %59, %cst_30 [1, 2] : vector<1x200x1xf32> to vector<1xf32>
    %61 = vector.shape_cast %60 : vector<1xf32> to vector<1x1x1xf32>
    %62 = vector.extract %61[0, 0, 0] : f32 from vector<1x1x1xf32>
    %63 = arith.addf %57, %62 : f32
    %c1_31 = arith.constant 1 : index
    %64 = memref.load %arg10[%c1_31] : memref<2xf32, #tpu.memory_space<smem>>
    memref.store %63, %arg10[%c1_31] : memref<2xf32, #tpu.memory_space<smem>>
    %c0_i32_32 = arith.constant 0 : i32
    %65 = arith.cmpi eq, %arg0, %c0_i32_32 : i32
    %66 = arith.extui %65 : i1 to i32
    %c0_i32_33 = arith.constant 0 : i32
    %67 = arith.cmpi ne, %66, %c0_i32_33 : i32
    scf.if %67 {
      %c0_34 = arith.constant 0 : index
      %68 = memref.load %arg10[%c0_34] : memref<2xf32, #tpu.memory_space<smem>>
      %c1_35 = arith.constant 1 : index
      %69 = memref.load %arg10[%c1_35] : memref<2xf32, #tpu.memory_space<smem>>
      %70 = arith.addf %68, %69 : f32
      %cst_36 = arith.constant 5.000000e-03 : f32
      %71 = arith.mulf %70, %cst_36 : f32
      %c0_37 = arith.constant 0 : index
      %c0_38 = arith.constant 0 : index
      %72 = memref.load %arg9[%c0_37, %c0_38] : memref<1x1xf32, #tpu.memory_space<smem>>
      memref.store %71, %arg9[%c0_37, %c0_38] : memref<1x1xf32, #tpu.memory_space<smem>>
    } else {
    }
    return
  }
  func.func @transform_0(%arg0: i32) -> (i32, i32) {
    %c0_i32 = arith.constant 0 : i32
    %c0_i32_0 = arith.constant 0 : i32
    return %arg0, %c0_i32 : i32, i32
  }
  func.func @transform_1(%arg0: i32) -> (i32, i32) {
    %c0_i32 = arith.constant 0 : i32
    %c0_i32_0 = arith.constant 0 : i32
    return %arg0, %c0_i32 : i32, i32
  }
  func.func @transform_2(%arg0: i32) -> (i32, i32) {
    %c0_i32 = arith.constant 0 : i32
    %c0_i32_0 = arith.constant 0 : i32
    return %arg0, %c0_i32 : i32, i32
  }
  func.func @transform_3(%arg0: i32) -> (i32, i32) {
    %c0_i32 = arith.constant 0 : i32
    %c0_i32_0 = arith.constant 0 : i32
    %c0_i32_1 = arith.constant 0 : i32
    return %c0_i32, %c0_i32_0 : i32, i32
  }
  func.func @transform_4(%arg0: i32) -> (i32, i32) {
    %c0_i32 = arith.constant 0 : i32
    %c0_i32_0 = arith.constant 0 : i32
    %c0_i32_1 = arith.constant 0 : i32
    return %c0_i32, %c0_i32_0 : i32, i32
  }
  func.func @transform_5(%arg0: i32) -> (i32, i32) {
    %c0_i32 = arith.constant 0 : i32
    %c0_i32_0 = arith.constant 0 : i32
    %c0_i32_1 = arith.constant 0 : i32
    return %c0_i32, %c0_i32_0 : i32, i32
  }
  func.func @transform_6(%arg0: i32) -> (i32, i32) {
    %c0_i32 = arith.constant 0 : i32
    %c0_i32_0 = arith.constant 0 : i32
    %c0_i32_1 = arith.constant 0 : i32
    return %c0_i32, %c0_i32_0 : i32, i32
  }
  func.func @transform_7(%arg0: i32) -> (i32, i32) {
    %c0_i32 = arith.constant 0 : i32
    %c0_i32_0 = arith.constant 0 : i32
    %c0_i32_1 = arith.constant 0 : i32
    return %c0_i32, %c0_i32_0 : i32, i32
  }
  func.func @transform_8(%arg0: i32) -> (i32, i32) {
    %c0_i32 = arith.constant 0 : i32
    %c0_i32_0 = arith.constant 0 : i32
    %c0_i32_1 = arith.constant 0 : i32
    return %c0_i32, %c0_i32_0 : i32, i32
  }
}

</mosaic_0001>

<llo_original>
// kernel: tpu_custom_call.1
$region0: #{tpu_custom_call.1}
  #allocation0 [shape = 'u32[]', space=smem, size = 0x4, offset = 0x4, fixed_abs, tag = 'smem constant byte address 0x4 - core index']
  #allocation1 [shape = 'u32[144,128]{1,0:T(1,128)}', space=vmem, size = 0x12000, scoped, tag = 'internal scratch']
  #allocation2 [shape = 'f32[2]{0:T(128)}', space=smem, size = 0x200, scoped, tag = 'scratch operand']
  #allocation3 [shape = 'f32[1,1]{1,0:T(1,128)S(1)}', space=vmem, size = 0x200, scoped, tag = 'scoped memory for tpu_custom_call.1']
  %s0 = inlined_call_operand.vmem [shape: f32[200,32], index: 0, kind: input, shape index: {}]
  %s1 = inlined_call_operand.vmem [shape: f32[200,32], index: 1, kind: input, shape index: {}]
  %s2 = inlined_call_operand.vmem [shape: f32[200,32], index: 2, kind: input, shape index: {}]
  %s3 = inlined_call_operand.vmem [shape: f32[32,16], index: 3, kind: input, shape index: {}]
  %s4 = inlined_call_operand.vmem [shape: f32[32,16], index: 4, kind: input, shape index: {}]
  %s5 = inlined_call_operand.vmem [shape: f32[1,16], index: 5, kind: input, shape index: {}]
  %s6 = inlined_call_operand.vmem [shape: f32[1,16], index: 6, kind: input, shape index: {}]
  %s7 = inlined_call_operand.<no memory space> [shape: f32[1,1], index: 7, kind: input, shape index: {}]
  %s8 = inlined_call_operand.hbm [shape: f32[1,1], index: 8, kind: output, shape index: {}]
  %s9 = sld [smem:[#allocation0]]
  $region50: #{tpu_custom_call.1} parent=0
    _
  %s11 = ssub.s32 1, %s9
  %s12 = scalar_select 0, %s11, %s9
  %v13 = vstv %s7
  %14 = vst [vmem:[#allocation3] sm:$0x1] %v13
  $region1: #{tpu_custom_call.1} parent=0
    #allocation4 [shape = 'u8[512]{0}', space=smem, size = 0x200, scoped, tag = 'output window, operand 0, single buffered']
    #allocation5 [shape = 's32[1]{0}', space=sflag, size = 0x4, scoped, tag = 'scoped memory for tpu_custom_call.1']
    %15 = vsyncpa [#allocation5], 0
    // Predicated region
    $region2: #{tpu_custom_call.1} parent=1 // pred_check
      _
    $region3: #{tpu_custom_call.1} parent=1 // pred_check_branch
      %17 = sbr.rel (0) target = $region5
    $region4: #{tpu_custom_call.1} parent=1 // pred_region
      _
    $region5: #{tpu_custom_call.1} parent=1 // pred_fallthru
      _
    // Predicated region
    $region6: #{tpu_custom_call.1} parent=1 // pred_check
      _
    $region7: #{tpu_custom_call.1} parent=1 // pred_check_branch
      %19 = sbr.rel (0) target = $region9
    $region8: #{tpu_custom_call.1} parent=1 // pred_region
      _
    $region9: #{tpu_custom_call.1} parent=1 // pred_fallthru
      _
    // Predicated region
    $region10: #{tpu_custom_call.1} parent=1 // pred_check
      _
    $region11: #{tpu_custom_call.1} parent=1 // pred_check_branch
      %21 = sbr.rel (0) target = $region13
    $region12: #{tpu_custom_call.1} parent=1 // pred_region
      _
    $region13: #{tpu_custom_call.1} parent=1 // pred_fallthru
      _
    // Predicated region
    $region14: #{tpu_custom_call.1} parent=1 // pred_check
      _
    $region15: #{tpu_custom_call.1} parent=1 // pred_check_branch
      %23 = sbr.rel (0) target = $region17
    $region16: #{tpu_custom_call.1} parent=1 // pred_region
      _
    $region17: #{tpu_custom_call.1} parent=1 // pred_fallthru
      _
    // Predicated region
    $region18: #{tpu_custom_call.1} parent=1 // pred_check
      _
    $region19: #{tpu_custom_call.1} parent=1 // pred_check_branch
      %25 = sbr.rel (0) target = $region21
    $region20: #{tpu_custom_call.1} parent=1 // pred_region
      _
    $region21: #{tpu_custom_call.1} parent=1 // pred_fallthru
      _
    // Predicated region
    $region22: #{tpu_custom_call.1} parent=1 // pred_check
      _
    $region23: #{tpu_custom_call.1} parent=1 // pred_check_branch
      %27 = sbr.rel (0) target = $region25
    $region24: #{tpu_custom_call.1} parent=1 // pred_region
      _
    $region25: #{tpu_custom_call.1} parent=1 // pred_fallthru
      _
    // Predicated region
    $region26: #{tpu_custom_call.1} parent=1 // pred_check
      _
    $region27: #{tpu_custom_call.1} parent=1 // pred_check_branch
      %29 = sbr.rel (0) target = $region29
    $region28: #{tpu_custom_call.1} parent=1 // pred_region
      _
    $region29: #{tpu_custom_call.1} parent=1 // pred_fallthru
      _
    // Predicated region
    $region30: #{tpu_custom_call.1} parent=1 // pred_check
      _
    $region31: #{tpu_custom_call.1} parent=1 // pred_check_branch
      %31 = sbr.rel (0) target = $region33
    $region32: #{tpu_custom_call.1} parent=1 // pred_region
      _
    $region33: #{tpu_custom_call.1} parent=1 // pred_fallthru
      _
    %p32 = scmp.eq.s32.totalorder 0, 0
    // Predicated region
    $region34: #{tpu_custom_call.1} parent=1 // pred_check
      %p33 = pneg %p32
    $region35: #{tpu_custom_call.1} parent=1 // pred_check_branch
      %35 = sbr.rel (%p33) target = $region37
    $region36: #{tpu_custom_call.1} parent=1 // pred_region
      %s36 = scalar_lea.smem [#allocation2], 0
      %37 = sst [smem:[%s36]] 0.0
      %s38 = scalar_lea.smem [#allocation2], 1
      %39 = sst [smem:[%s38]] 0.0
    $region37: #{tpu_custom_call.1} parent=1 // pred_fallthru
      _
    %v40 = vld [vmem:[%s0] sm:$0xff]
    %v41 = vld [vmem:[%s0 + $0x8] sm:$0xff]
    %v42 = vld [vmem:[%s0 + $0x10] sm:$0xff]
    %v43 = vld [vmem:[%s0 + $0x18] sm:$0xff]
    %v44 = vld [vmem:[%s0 + $0x20] sm:$0xff]
    %v45 = vld [vmem:[%s0 + $0x28] sm:$0xff]
    %v46 = vld [vmem:[%s0 + $0x30] sm:$0xff]
    %v47 = vld [vmem:[%s0 + $0x38] sm:$0xff]
    %v48 = vld [vmem:[%s0 + $0x40] sm:$0xff]
    %v49 = vld [vmem:[%s0 + $0x48] sm:$0xff]
    %v50 = vld [vmem:[%s0 + $0x50] sm:$0xff]
    %v51 = vld [vmem:[%s0 + $0x58] sm:$0xff]
    %v52 = vld [vmem:[%s0 + $0x60] sm:$0xff]
    %v53 = vld [vmem:[%s0 + $0x68] sm:$0xff]
    %v54 = vld [vmem:[%s0 + $0x70] sm:$0xff]
    %v55 = vld [vmem:[%s0 + $0x78] sm:$0xff]
    %v56 = vld [vmem:[%s0 + $0x80] sm:$0xff]
    %v57 = vld [vmem:[%s0 + $0x88] sm:$0xff]
    %v58 = vld [vmem:[%s0 + $0x90] sm:$0xff]
    %v59 = vld [vmem:[%s0 + $0x98] sm:$0xff]
    %v60 = vld [vmem:[%s0 + $0xa0] sm:$0xff]
    %v61 = vld [vmem:[%s0 + $0xa8] sm:$0xff]
    %v62 = vld [vmem:[%s0 + $0xb0] sm:$0xff]
    %v63 = vld [vmem:[%s0 + $0xb8] sm:$0xff]
    %v64 = vld [vmem:[%s0 + $0xc0] sm:$0xff]
    %v65 = vld [vmem:[%s3] sm:$0xff]
    %v66 = vld [vmem:[%s3 + $0x8] sm:$0xff]
    %v67 = vld [vmem:[%s3 + $0x10] sm:$0xff]
    %v68 = vld [vmem:[%s3 + $0x18] sm:$0xff]
    %vm69 = vcmask 261120
    %v71 = vsel %vm69, %v40, 0
    %v74 = vsel %vm69, %v41, 0
    %v77 = vsel %vm69, %v42, 0
    %v80 = vsel %vm69, %v43, 0
    %v83 = vsel %vm69, %v44, 0
    %v86 = vsel %vm69, %v45, 0
    %v89 = vsel %vm69, %v46, 0
    %v92 = vsel %vm69, %v47, 0
    %v95 = vsel %vm69, %v48, 0
    %v98 = vsel %vm69, %v49, 0
    %v101 = vsel %vm69, %v50, 0
    %v104 = vsel %vm69, %v51, 0
    %v107 = vsel %vm69, %v52, 0
    %v110 = vsel %vm69, %v53, 0
    %v113 = vsel %vm69, %v54, 0
    %v116 = vsel %vm69, %v55, 0
    %v119 = vsel %vm69, %v56, 0
    %v122 = vsel %vm69, %v57, 0
    %v125 = vsel %vm69, %v58, 0
    %v128 = vsel %vm69, %v59, 0
    %v131 = vsel %vm69, %v60, 0
    %v134 = vsel %vm69, %v61, 0
    %v137 = vsel %vm69, %v62, 0
    %v140 = vsel %vm69, %v63, 0
    %v143 = vsel %vm69, %v64, 0
    %145 = vmatprep.subr.mxu0 0.0
    %146 = vmatpush1.msra.mxu0 %v65
    %147 = vmatprep.subr.mxu0 0.0
    %148 = vmatpush1.msra.mxu0 %v66
    %149 = vmatprep.subr.mxu0 0.0
    %150 = vmatpush1.msra.mxu0 %v67
    %151 = vmatprep.subr.mxu0 0.0
    %152 = vmatpush1.msra.mxu0 %v68
    %153 = vmatprep.subr.mxu0 0.0
    %154 = vmatpush1.msra.mxu0 0.0
    %155 = vmatprep.subr.mxu0 0.0
    %156 = vmatpush1.msra.mxu0 0.0
    %157 = vmatprep.subr.mxu0 0.0
    %158 = vmatpush1.msra.mxu0 0.0
    %159 = vmatprep.subr.mxu0 0.0
    %160 = vmatpush1.msra.mxu0 0.0
    %161 = vmatprep.subr.mxu0 0.0
    %162 = vmatpush1.msra.mxu0 0.0
    %163 = vmatprep.subr.mxu0 0.0
    %164 = vmatpush1.msra.mxu0 0.0
    %165 = vmatprep.subr.mxu0 0.0
    %166 = vmatpush1.msra.mxu0 0.0
    %167 = vmatprep.subr.mxu0 0.0
    %168 = vmatpush1.msra.mxu0 0.0
    %169 = vmatprep.subr.mxu0 0.0
    %170 = vmatpush1.msra.mxu0 0.0
    %171 = vmatprep.subr.mxu0 0.0
    %172 = vmatpush1.msra.mxu0 0.0
    %173 = vmatprep.subr.mxu0 0.0
    %174 = vmatpush1.msra.mxu0 0.0
    %175 = vmatprep.subr.mxu0 0.0
    %176 = vmatpush1.msra.mxu0 0.0
    %177 = vmatprep.subr.mxu0 0.0
    %178 = vmatpush1.msra.mxu0 0.0
    %179 = vmatprep.subr.mxu0 0.0
    %180 = vmatpush1.msra.mxu0 0.0
    %181 = vmatprep.subr.mxu0 0.0
    %182 = vmatpush1.msra.mxu0 0.0
    %183 = vmatprep.subr.mxu0 0.0
    %184 = vmatpush1.msra.mxu0 0.0
    %185 = vmatprep.subr.mxu0 0.0
    %186 = vmatpush1.msra.mxu0 0.0
    %187 = vmatprep.subr.mxu0 0.0
    %188 = vmatpush1.msra.mxu0 0.0
    %189 = vmatprep.subr.mxu0 0.0
    %190 = vmatpush1.msra.mxu0 0.0
    %191 = vmatprep.subr.mxu0 0.0
    %192 = vmatpush1.msra.mxu0 0.0
    %193 = vmatprep.subr.mxu0 0.0
    %194 = vmatpush1.msra.mxu0 0.0
    %195 = vmatprep.subr.mxu0 0.0
    %196 = vmatpush1.msra.mxu0 0.0
    %197 = vmatprep.subr.mxu0 0.0
    %198 = vmatpush1.msra.mxu0 0.0
    %199 = vmatprep.subr.mxu0 0.0
    %200 = vmatpush1.msra.mxu0 0.0
    %201 = vmatprep.subr.mxu0 0.0
    %202 = vmatpush1.msra.mxu0 0.0
    %203 = vmatprep.subr.mxu0 0.0
    %204 = vmatpush1.msra.mxu0 0.0
    %205 = vmatprep.subr.mxu0 0.0
    %206 = vmatpush1.msra.mxu0 0.0
    %207 = vmatprep.subr.mxu0 0.0
    %208 = vmatpush1.msra.mxu0 0.0
    %209 = vmatprep.mubr.f32.mxu0 0.0
    %210 = vmatmul.mubr.f32.gmra.mrb[0].mxu0 %v71
    %v211 = vpop.f32.mrb[0].mxu0
    %v212 = vadd.f32 0.0, %v211
    %v213 = vpop.f32.mrb[0].mxu0
    %214 = vmatprep.mubr.f32.mxu0 0.0
    %215 = vmatmul.mubr.f32.gmra.mrb[0].mxu0 %v74
    %v216 = vpop.f32.mrb[0].mxu0
    %v217 = vadd.f32 0.0, %v216
    %v218 = vpop.f32.mrb[0].mxu0
    %219 = vmatprep.mubr.f32.mxu0 0.0
    %220 = vmatmul.mubr.f32.gmra.mrb[0].mxu0 %v77
    %v221 = vpop.f32.mrb[0].mxu0
    %v222 = vadd.f32 0.0, %v221
    %v223 = vpop.f32.mrb[0].mxu0
    %224 = vmatprep.mubr.f32.mxu0 0.0
    %225 = vmatmul.mubr.f32.gmra.mrb[0].mxu0 %v80
    %v226 = vpop.f32.mrb[0].mxu0
    %v227 = vadd.f32 0.0, %v226
    %v228 = vpop.f32.mrb[0].mxu0
    %229 = vmatprep.mubr.f32.mxu0 0.0
    %230 = vmatmul.mubr.f32.gmra.mrb[0].mxu0 %v83
    %v231 = vpop.f32.mrb[0].mxu0
    %v232 = vadd.f32 0.0, %v231
    %v233 = vpop.f32.mrb[0].mxu0
    %234 = vmatprep.mubr.f32.mxu0 0.0
    %235 = vmatmul.mubr.f32.gmra.mrb[0].mxu0 %v86
    %v236 = vpop.f32.mrb[0].mxu0
    %v237 = vadd.f32 0.0, %v236
    %v238 = vpop.f32.mrb[0].mxu0
    %239 = vmatprep.mubr.f32.mxu0 0.0
    %240 = vmatmul.mubr.f32.gmra.mrb[0].mxu0 %v89
    %v241 = vpop.f32.mrb[0].mxu0
    %v242 = vadd.f32 0.0, %v241
    %v243 = vpop.f32.mrb[0].mxu0
    %244 = vmatprep.mubr.f32.mxu0 0.0
    %245 = vmatmul.mubr.f32.gmra.mrb[0].mxu0 %v92
    %v246 = vpop.f32.mrb[0].mxu0
    %v247 = vadd.f32 0.0, %v246
    %v248 = vpop.f32.mrb[0].mxu0
    %249 = vmatprep.mubr.f32.mxu0 0.0
    %250 = vmatmul.mubr.f32.gmra.mrb[0].mxu0 %v95
    %v251 = vpop.f32.mrb[0].mxu0
    %v252 = vadd.f32 0.0, %v251
    %v253 = vpop.f32.mrb[0].mxu0
    %254 = vmatprep.mubr.f32.mxu0 0.0
    %255 = vmatmul.mubr.f32.gmra.mrb[0].mxu0 %v98
    %v256 = vpop.f32.mrb[0].mxu0
    %v257 = vadd.f32 0.0, %v256
    %v258 = vpop.f32.mrb[0].mxu0
    %259 = vmatprep.mubr.f32.mxu0 0.0
    %260 = vmatmul.mubr.f32.gmra.mrb[0].mxu0 %v101
    %v261 = vpop.f32.mrb[0].mxu0
    %v262 = vadd.f32 0.0, %v261
    %v263 = vpop.f32.mrb[0].mxu0
    %264 = vmatprep.mubr.f32.mxu0 0.0
    %265 = vmatmul.mubr.f32.gmra.mrb[0].mxu0 %v104
    %v266 = vpop.f32.mrb[0].mxu0
    %v267 = vadd.f32 0.0, %v266
    %v268 = vpop.f32.mrb[0].mxu0
    %269 = vmatprep.mubr.f32.mxu0 0.0
    %270 = vmatmul.mubr.f32.gmra.mrb[0].mxu0 %v107
    %v271 = vpop.f32.mrb[0].mxu0
    %v272 = vadd.f32 0.0, %v271
    %v273 = vpop.f32.mrb[0].mxu0
    %274 = vmatprep.mubr.f32.mxu0 0.0
    %275 = vmatmul.mubr.f32.gmra.mrb[0].mxu0 %v110
    %v276 = vpop.f32.mrb[0].mxu0
    %v277 = vadd.f32 0.0, %v276
    %v278 = vpop.f32.mrb[0].mxu0
    %279 = vmatprep.mubr.f32.mxu0 0.0
    %280 = vmatmul.mubr.f32.gmra.mrb[0].mxu0 %v113
    %v281 = vpop.f32.mrb[0].mxu0
    %v282 = vadd.f32 0.0, %v281
    %v283 = vpop.f32.mrb[0].mxu0
    %284 = vmatprep.mubr.f32.mxu0 0.0
    %285 = vmatmul.mubr.f32.gmra.mrb[0].mxu0 %v116
    %v286 = vpop.f32.mrb[0].mxu0
    %v287 = vadd.f32 0.0, %v286
    %v288 = vpop.f32.mrb[0].mxu0
    %289 = vmatprep.mubr.f32.mxu0 0.0
    %290 = vmatmul.mubr.f32.gmra.mrb[0].mxu0 %v119
    %v291 = vpop.f32.mrb[0].mxu0
    %v292 = vadd.f32 0.0, %v291
    %v293 = vpop.f32.mrb[0].mxu0
    %294 = vmatprep.mubr.f32.mxu0 0.0
    %295 = vmatmul.mubr.f32.gmra.mrb[0].mxu0 %v122
    %v296 = vpop.f32.mrb[0].mxu0
    %v297 = vadd.f32 0.0, %v296
    %v298 = vpop.f32.mrb[0].mxu0
    %299 = vmatprep.mubr.f32.mxu0 0.0
    %300 = vmatmul.mubr.f32.gmra.mrb[0].mxu0 %v125
    %v301 = vpop.f32.mrb[0].mxu0
    %v302 = vadd.f32 0.0, %v301
    %v303 = vpop.f32.mrb[0].mxu0
    %304 = vmatprep.mubr.f32.mxu0 0.0
    %305 = vmatmul.mubr.f32.gmra.mrb[0].mxu0 %v128
    %v306 = vpop.f32.mrb[0].mxu0
    %v307 = vadd.f32 0.0, %v306
    %v308 = vpop.f32.mrb[0].mxu0
    %309 = vmatprep.mubr.f32.mxu0 0.0
    %310 = vmatmul.mubr.f32.gmra.mrb[0].mxu0 %v131
    %v311 = vpop.f32.mrb[0].mxu0
    %v312 = vadd.f32 0.0, %v311
    %v313 = vpop.f32.mrb[0].mxu0
    %314 = vmatprep.mubr.f32.mxu0 0.0
    %315 = vmatmul.mubr.f32.gmra.mrb[0].mxu0 %v134
    %v316 = vpop.f32.mrb[0].mxu0
    %v317 = vadd.f32 0.0, %v316
    %v318 = vpop.f32.mrb[0].mxu0
    %319 = vmatprep.mubr.f32.mxu0 0.0
    %320 = vmatmul.mubr.f32.gmra.mrb[0].mxu0 %v137
    %v321 = vpop.f32.mrb[0].mxu0
    %v322 = vadd.f32 0.0, %v321
    %v323 = vpop.f32.mrb[0].mxu0
    %324 = vmatprep.mubr.f32.mxu0 0.0
    %325 = vmatmul.mubr.f32.gmra.mrb[0].mxu0 %v140
    %v326 = vpop.f32.mrb[0].mxu0
    %v327 = vadd.f32 0.0, %v326
    %v328 = vpop.f32.mrb[0].mxu0
    %329 = vmatprep.mubr.f32.mxu0 0.0
    %330 = vmatmul.mubr.f32.gmra.mrb[0].mxu0 %v143
    %v331 = vpop.f32.mrb[0].mxu0
    %v332 = vadd.f32 0.0, %v331
    %v333 = vpop.f32.mrb[0].mxu0
    %334 = vdwg.mxu0
    %v335 = vld [vmem:[%s1] sm:$0xff]
    %v336 = vld [vmem:[%s1 + $0x8] sm:$0xff]
    %v337 = vld [vmem:[%s1 + $0x10] sm:$0xff]
    %v338 = vld [vmem:[%s1 + $0x18] sm:$0xff]
    %v339 = vld [vmem:[%s1 + $0x20] sm:$0xff]
    %v340 = vld [vmem:[%s1 + $0x28] sm:$0xff]
    %v341 = vld [vmem:[%s1 + $0x30] sm:$0xff]
    %v342 = vld [vmem:[%s1 + $0x38] sm:$0xff]
    %v343 = vld [vmem:[%s1 + $0x40] sm:$0xff]
    %v344 = vld [vmem:[%s1 + $0x48] sm:$0xff]
    %v345 = vld [vmem:[%s1 + $0x50] sm:$0xff]
    %v346 = vld [vmem:[%s1 + $0x58] sm:$0xff]
    %v347 = vld [vmem:[%s1 + $0x60] sm:$0xff]
    %v348 = vld [vmem:[%s1 + $0x68] sm:$0xff]
    %v349 = vld [vmem:[%s1 + $0x70] sm:$0xff]
    %v350 = vld [vmem:[%s1 + $0x78] sm:$0xff]
    %v351 = vld [vmem:[%s1 + $0x80] sm:$0xff]
    %v352 = vld [vmem:[%s1 + $0x88] sm:$0xff]
    %v353 = vld [vmem:[%s1 + $0x90] sm:$0xff]
    %v354 = vld [vmem:[%s1 + $0x98] sm:$0xff]
    %v355 = vld [vmem:[%s1 + $0xa0] sm:$0xff]
    %v356 = vld [vmem:[%s1 + $0xa8] sm:$0xff]
    %v357 = vld [vmem:[%s1 + $0xb0] sm:$0xff]
    %v358 = vld [vmem:[%s1 + $0xb8] sm:$0xff]
    %v359 = vld [vmem:[%s1 + $0xc0] sm:$0xff]
    %v360 = vld [vmem:[%s4] sm:$0xff]
    %v361 = vld [vmem:[%s4 + $0x8] sm:$0xff]
    %v362 = vld [vmem:[%s4 + $0x10] sm:$0xff]
    %v363 = vld [vmem:[%s4 + $0x18] sm:$0xff]
    %v365 = vsel %vm69, %v335, 0
    %v368 = vsel %vm69, %v336, 0
    %v371 = vsel %vm69, %v337, 0
    %v374 = vsel %vm69, %v338, 0
    %v377 = vsel %vm69, %v339, 0
    %v380 = vsel %vm69, %v340, 0
    %v383 = vsel %vm69, %v341, 0
    %v386 = vsel %vm69, %v342, 0
    %v389 = vsel %vm69, %v343, 0
    %v392 = vsel %vm69, %v344, 0
    %v395 = vsel %vm69, %v345, 0
    %v398 = vsel %vm69, %v346, 0
    %v401 = vsel %vm69, %v347, 0
    %v404 = vsel %vm69, %v348, 0
    %v407 = vsel %vm69, %v349, 0
    %v410 = vsel %vm69, %v350, 0
    %v413 = vsel %vm69, %v351, 0
    %v416 = vsel %vm69, %v352, 0
    %v419 = vsel %vm69, %v353, 0
    %v422 = vsel %vm69, %v354, 0
    %v425 = vsel %vm69, %v355, 0
    %v428 = vsel %vm69, %v356, 0
    %v431 = vsel %vm69, %v357, 0
    %v434 = vsel %vm69, %v358, 0
    %v437 = vsel %vm69, %v359, 0
    %439 = vmatprep.subr.mxu0 0.0
    %440 = vmatpush1.msra.mxu0 %v360
    %441 = vmatprep.subr.mxu0 0.0
    %442 = vmatpush1.msra.mxu0 %v361
    %443 = vmatprep.subr.mxu0 0.0
    %444 = vmatpush1.msra.mxu0 %v362
    %445 = vmatprep.subr.mxu0 0.0
    %446 = vmatpush1.msra.mxu0 %v363
    %447 = vmatprep.subr.mxu0 0.0
    %448 = vmatpush1.msra.mxu0 0.0
    %449 = vmatprep.subr.mxu0 0.0
    %450 = vmatpush1.msra.mxu0 0.0
    %451 = vmatprep.subr.mxu0 0.0
    %452 = vmatpush1.msra.mxu0 0.0
    %453 = vmatprep.subr.mxu0 0.0
    %454 = vmatpush1.msra.mxu0 0.0
    %455 = vmatprep.subr.mxu0 0.0
    %456 = vmatpush1.msra.mxu0 0.0
    %457 = vmatprep.subr.mxu0 0.0
    %458 = vmatpush1.msra.mxu0 0.0
    %459 = vmatprep.subr.mxu0 0.0
    %460 = vmatpush1.msra.mxu0 0.0
    %461 = vmatprep.subr.mxu0 0.0
    %462 = vmatpush1.msra.mxu0 0.0
    %463 = vmatprep.subr.mxu0 0.0
    %464 = vmatpush1.msra.mxu0 0.0
    %465 = vmatprep.subr.mxu0 0.0
    %466 = vmatpush1.msra.mxu0 0.0
    %467 = vmatprep.subr.mxu0 0.0
    %468 = vmatpush1.msra.mxu0 0.0
    %469 = vmatprep.subr.mxu0 0.0
    %470 = vmatpush1.msra.mxu0 0.0
    %471 = vmatprep.subr.mxu0 0.0
    %472 = vmatpush1.msra.mxu0 0.0
    %473 = vmatprep.subr.mxu0 0.0
    %474 = vmatpush1.msra.mxu0 0.0
    %475 = vmatprep.subr.mxu0 0.0
    %476 = vmatpush1.msra.mxu0 0.0
    %477 = vmatprep.subr.mxu0 0.0
    %478 = vmatpush1.msra.mxu0 0.0
    %479 = vmatprep.subr.mxu0 0.0
    %480 = vmatpush1.msra.mxu0 0.0
    %481 = vmatprep.subr.mxu0 0.0
    %482 = vmatpush1.msra.mxu0 0.0
    %483 = vmatprep.subr.mxu0 0.0
    %484 = vmatpush1.msra.mxu0 0.0
    %485 = vmatprep.subr.mxu0 0.0
    %486 = vmatpush1.msra.mxu0 0.0
    %487 = vmatprep.subr.mxu0 0.0
    %488 = vmatpush1.msra.mxu0 0.0
    %489 = vmatprep.subr.mxu0 0.0
    %490 = vmatpush1.msra.mxu0 0.0
    %491 = vmatprep.subr.mxu0 0.0
    %492 = vmatpush1.msra.mxu0 0.0
    %493 = vmatprep.subr.mxu0 0.0
    %494 = vmatpush1.msra.mxu0 0.0
    %495 = vmatprep.subr.mxu0 0.0
    %496 = vmatpush1.msra.mxu0 0.0
    %497 = vmatprep.subr.mxu0 0.0
    %498 = vmatpush1.msra.mxu0 0.0
    %499 = vmatprep.subr.mxu0 0.0
    %500 = vmatpush1.msra.mxu0 0.0
    %501 = vmatprep.subr.mxu0 0.0
    %502 = vmatpush1.msra.mxu0 0.0
    %503 = vmatprep.mubr.f32.mxu0 0.0
    %504 = vmatmul.mubr.f32.gmra.mrb[0].mxu0 %v365
    %v505 = vpop.f32.mrb[0].mxu0
    %v506 = vadd.f32 0.0, %v505
    %v507 = vpop.f32.mrb[0].mxu0
    %508 = vmatprep.mubr.f32.mxu0 0.0
    %509 = vmatmul.mubr.f32.gmra.mrb[0].mxu0 %v368
    %v510 = vpop.f32.mrb[0].mxu0
    %v511 = vadd.f32 0.0, %v510
    %v512 = vpop.f32.mrb[0].mxu0
    %513 = vmatprep.mubr.f32.mxu0 0.0
    %514 = vmatmul.mubr.f32.gmra.mrb[0].mxu0 %v371
    %v515 = vpop.f32.mrb[0].mxu0
    %v516 = vadd.f32 0.0, %v515
    %v517 = vpop.f32.mrb[0].mxu0
    %518 = vmatprep.mubr.f32.mxu0 0.0
    %519 = vmatmul.mubr.f32.gmra.mrb[0].mxu0 %v374
    %v520 = vpop.f32.mrb[0].mxu0
    %v521 = vadd.f32 0.0, %v520
    %v522 = vpop.f32.mrb[0].mxu0
    %523 = vmatprep.mubr.f32.mxu0 0.0
    %524 = vmatmul.mubr.f32.gmra.mrb[0].mxu0 %v377
    %v525 = vpop.f32.mrb[0].mxu0
    %v526 = vadd.f32 0.0, %v525
    %v527 = vpop.f32.mrb[0].mxu0
    %528 = vmatprep.mubr.f32.mxu0 0.0
    %529 = vmatmul.mubr.f32.gmra.mrb[0].mxu0 %v380
    %v530 = vpop.f32.mrb[0].mxu0
    %v531 = vadd.f32 0.0, %v530
    %v532 = vpop.f32.mrb[0].mxu0
    %533 = vmatprep.mubr.f32.mxu0 0.0
    %534 = vmatmul.mubr.f32.gmra.mrb[0].mxu0 %v383
    %v535 = vpop.f32.mrb[0].mxu0
    %v536 = vadd.f32 0.0, %v535
    %v537 = vpop.f32.mrb[0].mxu0
    %538 = vmatprep.mubr.f32.mxu0 0.0
    %539 = vmatmul.mubr.f32.gmra.mrb[0].mxu0 %v386
    %v540 = vpop.f32.mrb[0].mxu0
    %v541 = vadd.f32 0.0, %v540
    %v542 = vpop.f32.mrb[0].mxu0
    %543 = vmatprep.mubr.f32.mxu0 0.0
    %544 = vmatmul.mubr.f32.gmra.mrb[0].mxu0 %v389
    %v545 = vpop.f32.mrb[0].mxu0
    %v546 = vadd.f32 0.0, %v545
    %v547 = vpop.f32.mrb[0].mxu0
    %548 = vmatprep.mubr.f32.mxu0 0.0
    %549 = vmatmul.mubr.f32.gmra.mrb[0].mxu0 %v392
    %v550 = vpop.f32.mrb[0].mxu0
    %v551 = vadd.f32 0.0, %v550
    %v552 = vpop.f32.mrb[0].mxu0
    %553 = vmatprep.mubr.f32.mxu0 0.0
    %554 = vmatmul.mubr.f32.gmra.mrb[0].mxu0 %v395
    %v555 = vpop.f32.mrb[0].mxu0
    %v556 = vadd.f32 0.0, %v555
    %v557 = vpop.f32.mrb[0].mxu0
    %558 = vmatprep.mubr.f32.mxu0 0.0
    %559 = vmatmul.mubr.f32.gmra.mrb[0].mxu0 %v398
    %v560 = vpop.f32.mrb[0].mxu0
    %v561 = vadd.f32 0.0, %v560
    %v562 = vpop.f32.mrb[0].mxu0
    %563 = vmatprep.mubr.f32.mxu0 0.0
    %564 = vmatmul.mubr.f32.gmra.mrb[0].mxu0 %v401
    %v565 = vpop.f32.mrb[0].mxu0
    %v566 = vadd.f32 0.0, %v565
    %v567 = vpop.f32.mrb[0].mxu0
    %568 = vmatprep.mubr.f32.mxu0 0.0
    %569 = vmatmul.mubr.f32.gmra.mrb[0].mxu0 %v404
    %v570 = vpop.f32.mrb[0].mxu0
    %v571 = vadd.f32 0.0, %v570
    %v572 = vpop.f32.mrb[0].mxu0
    %573 = vmatprep.mubr.f32.mxu0 0.0
    %574 = vmatmul.mubr.f32.gmra.mrb[0].mxu0 %v407
    %v575 = vpop.f32.mrb[0].mxu0
    %v576 = vadd.f32 0.0, %v575
    %v577 = vpop.f32.mrb[0].mxu0
    %578 = vmatprep.mubr.f32.mxu0 0.0
    %579 = vmatmul.mubr.f32.gmra.mrb[0].mxu0 %v410
    %v580 = vpop.f32.mrb[0].mxu0
    %v581 = vadd.f32 0.0, %v580
    %v582 = vpop.f32.mrb[0].mxu0
    %583 = vmatprep.mubr.f32.mxu0 0.0
    %584 = vmatmul.mubr.f32.gmra.mrb[0].mxu0 %v413
    %v585 = vpop.f32.mrb[0].mxu0
    %v586 = vadd.f32 0.0, %v585
    %v587 = vpop.f32.mrb[0].mxu0
    %588 = vmatprep.mubr.f32.mxu0 0.0
    %589 = vmatmul.mubr.f32.gmra.mrb[0].mxu0 %v416
    %v590 = vpop.f32.mrb[0].mxu0
    %v591 = vadd.f32 0.0, %v590
    %v592 = vpop.f32.mrb[0].mxu0
    %593 = vmatprep.mubr.f32.mxu0 0.0
    %594 = vmatmul.mubr.f32.gmra.mrb[0].mxu0 %v419
    %v595 = vpop.f32.mrb[0].mxu0
    %v596 = vadd.f32 0.0, %v595
    %v597 = vpop.f32.mrb[0].mxu0
    %598 = vmatprep.mubr.f32.mxu0 0.0
    %599 = vmatmul.mubr.f32.gmra.mrb[0].mxu0 %v422
    %v600 = vpop.f32.mrb[0].mxu0
    %v601 = vadd.f32 0.0, %v600
    %v602 = vpop.f32.mrb[0].mxu0
    %603 = vmatprep.mubr.f32.mxu0 0.0
    %604 = vmatmul.mubr.f32.gmra.mrb[0].mxu0 %v425
    %v605 = vpop.f32.mrb[0].mxu0
    %v606 = vadd.f32 0.0, %v605
    %v607 = vpop.f32.mrb[0].mxu0
    %608 = vmatprep.mubr.f32.mxu0 0.0
    %609 = vmatmul.mubr.f32.gmra.mrb[0].mxu0 %v428
    %v610 = vpop.f32.mrb[0].mxu0
    %v611 = vadd.f32 0.0, %v610
    %v612 = vpop.f32.mrb[0].mxu0
    %613 = vmatprep.mubr.f32.mxu0 0.0
    %614 = vmatmul.mubr.f32.gmra.mrb[0].mxu0 %v431
    %v615 = vpop.f32.mrb[0].mxu0
    %v616 = vadd.f32 0.0, %v615
    %v617 = vpop.f32.mrb[0].mxu0
    %618 = vmatprep.mubr.f32.mxu0 0.0
    %619 = vmatmul.mubr.f32.gmra.mrb[0].mxu0 %v434
    %v620 = vpop.f32.mrb[0].mxu0
    %v621 = vadd.f32 0.0, %v620
    %v622 = vpop.f32.mrb[0].mxu0
    %623 = vmatprep.mubr.f32.mxu0 0.0
    %624 = vmatmul.mubr.f32.gmra.mrb[0].mxu0 %v437
    %v625 = vpop.f32.mrb[0].mxu0
    %v626 = vadd.f32 0.0, %v625
    %v627 = vpop.f32.mrb[0].mxu0
    %628 = vdwg.mxu0
    %v629 = vld [vmem:[%s2] sm:$0xff]
    %v630 = vld [vmem:[%s2 + $0x8] sm:$0xff]
    %v631 = vld [vmem:[%s2 + $0x10] sm:$0xff]
    %v632 = vld [vmem:[%s2 + $0x18] sm:$0xff]
    %v633 = vld [vmem:[%s2 + $0x20] sm:$0xff]
    %v634 = vld [vmem:[%s2 + $0x28] sm:$0xff]
    %v635 = vld [vmem:[%s2 + $0x30] sm:$0xff]
    %v636 = vld [vmem:[%s2 + $0x38] sm:$0xff]
    %v637 = vld [vmem:[%s2 + $0x40] sm:$0xff]
    %v638 = vld [vmem:[%s2 + $0x48] sm:$0xff]
    %v639 = vld [vmem:[%s2 + $0x50] sm:$0xff]
    %v640 = vld [vmem:[%s2 + $0x58] sm:$0xff]
    %v641 = vld [vmem:[%s2 + $0x60] sm:$0xff]
    %v642 = vld [vmem:[%s2 + $0x68] sm:$0xff]
    %v643 = vld [vmem:[%s2 + $0x70] sm:$0xff]
    %v644 = vld [vmem:[%s2 + $0x78] sm:$0xff]
    %v645 = vld [vmem:[%s2 + $0x80] sm:$0xff]
    %v646 = vld [vmem:[%s2 + $0x88] sm:$0xff]
    %v647 = vld [vmem:[%s2 + $0x90] sm:$0xff]
    %v648 = vld [vmem:[%s2 + $0x98] sm:$0xff]
    %v649 = vld [vmem:[%s2 + $0xa0] sm:$0xff]
    %v650 = vld [vmem:[%s2 + $0xa8] sm:$0xff]
    %v651 = vld [vmem:[%s2 + $0xb0] sm:$0xff]
    %v652 = vld [vmem:[%s2 + $0xb8] sm:$0xff]
    %v653 = vld [vmem:[%s2 + $0xc0] sm:$0xff]
    %v655 = vsel %vm69, %v629, 0
    %v658 = vsel %vm69, %v630, 0
    %v661 = vsel %vm69, %v631, 0
    %v664 = vsel %vm69, %v632, 0
    %v667 = vsel %vm69, %v633, 0
    %v670 = vsel %vm69, %v634, 0
    %v673 = vsel %vm69, %v635, 0
    %v676 = vsel %vm69, %v636, 0
    %v679 = vsel %vm69, %v637, 0
    %v682 = vsel %vm69, %v638, 0
    %v685 = vsel %vm69, %v639, 0
    %v688 = vsel %vm69, %v640, 0
    %v691 = vsel %vm69, %v641, 0
    %v694 = vsel %vm69, %v642, 0
    %v697 = vsel %vm69, %v643, 0
    %v700 = vsel %vm69, %v644, 0
    %v703 = vsel %vm69, %v645, 0
    %v706 = vsel %vm69, %v646, 0
    %v709 = vsel %vm69, %v647, 0
    %v712 = vsel %vm69, %v648, 0
    %v715 = vsel %vm69, %v649, 0
    %v718 = vsel %vm69, %v650, 0
    %v721 = vsel %vm69, %v651, 0
    %v724 = vsel %vm69, %v652, 0
    %v727 = vsel %vm69, %v653, 0
    %729 = vmatprep.subr.mxu0 0.0
    %730 = vmatpush1.msra.mxu0 %v360
    %731 = vmatprep.subr.mxu0 0.0
    %732 = vmatpush1.msra.mxu0 %v361
    %733 = vmatprep.subr.mxu0 0.0
    %734 = vmatpush1.msra.mxu0 %v362
    %735 = vmatprep.subr.mxu0 0.0
    %736 = vmatpush1.msra.mxu0 %v363
    %737 = vmatprep.subr.mxu0 0.0
    %738 = vmatpush1.msra.mxu0 0.0
    %739 = vmatprep.subr.mxu0 0.0
    %740 = vmatpush1.msra.mxu0 0.0
    %741 = vmatprep.subr.mxu0 0.0
    %742 = vmatpush1.msra.mxu0 0.0
    %743 = vmatprep.subr.mxu0 0.0
    %744 = vmatpush1.msra.mxu0 0.0
    %745 = vmatprep.subr.mxu0 0.0
    %746 = vmatpush1.msra.mxu0 0.0
    %747 = vmatprep.subr.mxu0 0.0
    %748 = vmatpush1.msra.mxu0 0.0
    %749 = vmatprep.subr.mxu0 0.0
    %750 = vmatpush1.msra.mxu0 0.0
    %751 = vmatprep.subr.mxu0 0.0
    %752 = vmatpush1.msra.mxu0 0.0
    %753 = vmatprep.subr.mxu0 0.0
    %754 = vmatpush1.msra.mxu0 0.0
    %755 = vmatprep.subr.mxu0 0.0
    %756 = vmatpush1.msra.mxu0 0.0
    %757 = vmatprep.subr.mxu0 0.0
    %758 = vmatpush1.msra.mxu0 0.0
    %759 = vmatprep.subr.mxu0 0.0
    %760 = vmatpush1.msra.mxu0 0.0
    %761 = vmatprep.subr.mxu0 0.0
    %762 = vmatpush1.msra.mxu0 0.0
    %763 = vmatprep.subr.mxu0 0.0
    %764 = vmatpush1.msra.mxu0 0.0
    %765 = vmatprep.subr.mxu0 0.0
    %766 = vmatpush1.msra.mxu0 0.0
    %767 = vmatprep.subr.mxu0 0.0
    %768 = vmatpush1.msra.mxu0 0.0
    %769 = vmatprep.subr.mxu0 0.0
    %770 = vmatpush1.msra.mxu0 0.0
    %771 = vmatprep.subr.mxu0 0.0
    %772 = vmatpush1.msra.mxu0 0.0
    %773 = vmatprep.subr.mxu0 0.0
    %774 = vmatpush1.msra.mxu0 0.0
    %775 = vmatprep.subr.mxu0 0.0
    %776 = vmatpush1.msra.mxu0 0.0
    %777 = vmatprep.subr.mxu0 0.0
    %778 = vmatpush1.msra.mxu0 0.0
    %779 = vmatprep.subr.mxu0 0.0
    %780 = vmatpush1.msra.mxu0 0.0
    %781 = vmatprep.subr.mxu0 0.0
    %782 = vmatpush1.msra.mxu0 0.0
    %783 = vmatprep.subr.mxu0 0.0
    %784 = vmatpush1.msra.mxu0 0.0
    %785 = vmatprep.subr.mxu0 0.0
    %786 = vmatpush1.msra.mxu0 0.0
    %787 = vmatprep.subr.mxu0 0.0
    %788 = vmatpush1.msra.mxu0 0.0
    %789 = vmatprep.subr.mxu0 0.0
    %790 = vmatpush1.msra.mxu0 0.0
    %791 = vmatprep.subr.mxu0 0.0
    %792 = vmatpush1.msra.mxu0 0.0
    %793 = vmatprep.mubr.f32.mxu0 0.0
    %794 = vmatmul.mubr.f32.gmra.mrb[0].mxu0 %v655
    %v795 = vpop.f32.mrb[0].mxu0
    %v796 = vadd.f32 0.0, %v795
    %v797 = vpop.f32.mrb[0].mxu0
    %798 = vmatprep.mubr.f32.mxu0 0.0
    %799 = vmatmul.mubr.f32.gmra.mrb[0].mxu0 %v658
    %v800 = vpop.f32.mrb[0].mxu0
    %v801 = vadd.f32 0.0, %v800
    %v802 = vpop.f32.mrb[0].mxu0
    %803 = vmatprep.mubr.f32.mxu0 0.0
    %804 = vmatmul.mubr.f32.gmra.mrb[0].mxu0 %v661
    %v805 = vpop.f32.mrb[0].mxu0
    %v806 = vadd.f32 0.0, %v805
    %v807 = vpop.f32.mrb[0].mxu0
    %808 = vmatprep.mubr.f32.mxu0 0.0
    %809 = vmatmul.mubr.f32.gmra.mrb[0].mxu0 %v664
    %v810 = vpop.f32.mrb[0].mxu0
    %v811 = vadd.f32 0.0, %v810
    %v812 = vpop.f32.mrb[0].mxu0
    %813 = vmatprep.mubr.f32.mxu0 0.0
    %814 = vmatmul.mubr.f32.gmra.mrb[0].mxu0 %v667
    %v815 = vpop.f32.mrb[0].mxu0
    %v816 = vadd.f32 0.0, %v815
    %v817 = vpop.f32.mrb[0].mxu0
    %818 = vmatprep.mubr.f32.mxu0 0.0
    %819 = vmatmul.mubr.f32.gmra.mrb[0].mxu0 %v670
    %v820 = vpop.f32.mrb[0].mxu0
    %v821 = vadd.f32 0.0, %v820
    %v822 = vpop.f32.mrb[0].mxu0
    %823 = vmatprep.mubr.f32.mxu0 0.0
    %824 = vmatmul.mubr.f32.gmra.mrb[0].mxu0 %v673
    %v825 = vpop.f32.mrb[0].mxu0
    %v826 = vadd.f32 0.0, %v825
    %v827 = vpop.f32.mrb[0].mxu0
    %828 = vmatprep.mubr.f32.mxu0 0.0
    %829 = vmatmul.mubr.f32.gmra.mrb[0].mxu0 %v676
    %v830 = vpop.f32.mrb[0].mxu0
    %v831 = vadd.f32 0.0, %v830
    %v832 = vpop.f32.mrb[0].mxu0
    %833 = vmatprep.mubr.f32.mxu0 0.0
    %834 = vmatmul.mubr.f32.gmra.mrb[0].mxu0 %v679
    %v835 = vpop.f32.mrb[0].mxu0
    %v836 = vadd.f32 0.0, %v835
    %v837 = vpop.f32.mrb[0].mxu0
    %838 = vmatprep.mubr.f32.mxu0 0.0
    %839 = vmatmul.mubr.f32.gmra.mrb[0].mxu0 %v682
    %v840 = vpop.f32.mrb[0].mxu0
    %v841 = vadd.f32 0.0, %v840
    %v842 = vpop.f32.mrb[0].mxu0
    %843 = vmatprep.mubr.f32.mxu0 0.0
    %844 = vmatmul.mubr.f32.gmra.mrb[0].mxu0 %v685
    %v845 = vpop.f32.mrb[0].mxu0
    %v846 = vadd.f32 0.0, %v845
    %v847 = vpop.f32.mrb[0].mxu0
    %848 = vmatprep.mubr.f32.mxu0 0.0
    %849 = vmatmul.mubr.f32.gmra.mrb[0].mxu0 %v688
    %v850 = vpop.f32.mrb[0].mxu0
    %v851 = vadd.f32 0.0, %v850
    %v852 = vpop.f32.mrb[0].mxu0
    %853 = vmatprep.mubr.f32.mxu0 0.0
    %854 = vmatmul.mubr.f32.gmra.mrb[0].mxu0 %v691
    %v855 = vpop.f32.mrb[0].mxu0
    %v856 = vadd.f32 0.0, %v855
    %v857 = vpop.f32.mrb[0].mxu0
    %858 = vmatprep.mubr.f32.mxu0 0.0
    %859 = vmatmul.mubr.f32.gmra.mrb[0].mxu0 %v694
    %v860 = vpop.f32.mrb[0].mxu0
    %v861 = vadd.f32 0.0, %v860
    %v862 = vpop.f32.mrb[0].mxu0
    %863 = vmatprep.mubr.f32.mxu0 0.0
    %864 = vmatmul.mubr.f32.gmra.mrb[0].mxu0 %v697
    %v865 = vpop.f32.mrb[0].mxu0
    %v866 = vadd.f32 0.0, %v865
    %v867 = vpop.f32.mrb[0].mxu0
    %868 = vmatprep.mubr.f32.mxu0 0.0
    %869 = vmatmul.mubr.f32.gmra.mrb[0].mxu0 %v700
    %v870 = vpop.f32.mrb[0].mxu0
    %v871 = vadd.f32 0.0, %v870
    %v872 = vpop.f32.mrb[0].mxu0
    %873 = vmatprep.mubr.f32.mxu0 0.0
    %874 = vmatmul.mubr.f32.gmra.mrb[0].mxu0 %v703
    %v875 = vpop.f32.mrb[0].mxu0
    %v876 = vadd.f32 0.0, %v875
    %v877 = vpop.f32.mrb[0].mxu0
    %878 = vmatprep.mubr.f32.mxu0 0.0
    %879 = vmatmul.mubr.f32.gmra.mrb[0].mxu0 %v706
    %v880 = vpop.f32.mrb[0].mxu0
    %v881 = vadd.f32 0.0, %v880
    %v882 = vpop.f32.mrb[0].mxu0
    %883 = vmatprep.mubr.f32.mxu0 0.0
    %884 = vmatmul.mubr.f32.gmra.mrb[0].mxu0 %v709
    %v885 = vpop.f32.mrb[0].mxu0
    %v886 = vadd.f32 0.0, %v885
    %v887 = vpop.f32.mrb[0].mxu0
    %888 = vmatprep.mubr.f32.mxu0 0.0
    %889 = vmatmul.mubr.f32.gmra.mrb[0].mxu0 %v712
    %v890 = vpop.f32.mrb[0].mxu0
    %v891 = vadd.f32 0.0, %v890
    %v892 = vpop.f32.mrb[0].mxu0
    %893 = vmatprep.mubr.f32.mxu0 0.0
    %894 = vmatmul.mubr.f32.gmra.mrb[0].mxu0 %v715
    %v895 = vpop.f32.mrb[0].mxu0
    %v896 = vadd.f32 0.0, %v895
    %v897 = vpop.f32.mrb[0].mxu0
    %898 = vmatprep.mubr.f32.mxu0 0.0
    %899 = vmatmul.mubr.f32.gmra.mrb[0].mxu0 %v718
    %v900 = vpop.f32.mrb[0].mxu0
    %v901 = vadd.f32 0.0, %v900
    %v902 = vpop.f32.mrb[0].mxu0
    %903 = vmatprep.mubr.f32.mxu0 0.0
    %904 = vmatmul.mubr.f32.gmra.mrb[0].mxu0 %v721
    %v905 = vpop.f32.mrb[0].mxu0
    %v906 = vadd.f32 0.0, %v905
    %v907 = vpop.f32.mrb[0].mxu0
    %908 = vmatprep.mubr.f32.mxu0 0.0
    %909 = vmatmul.mubr.f32.gmra.mrb[0].mxu0 %v724
    %v910 = vpop.f32.mrb[0].mxu0
    %v911 = vadd.f32 0.0, %v910
    %v912 = vpop.f32.mrb[0].mxu0
    %913 = vmatprep.mubr.f32.mxu0 0.0
    %914 = vmatmul.mubr.f32.gmra.mrb[0].mxu0 %v727
    %v915 = vpop.f32.mrb[0].mxu0
    %v916 = vadd.f32 0.0, %v915
    %v917 = vpop.f32.mrb[0].mxu0
    %918 = vdwg.mxu0
    %v919 = vld [vmem:[%s5] sm:$0x1]
    %v920 = vld [vmem:[%s6] sm:$0x1]
    %v921 = vld [vmem:[#allocation3] sm:$0x1]
    %v922 = vadd.f32 %v212, %v506
    %v923 = vadd.f32 %v217, %v511
    %v924 = vadd.f32 %v222, %v516
    %v925 = vadd.f32 %v227, %v521
    %v926 = vadd.f32 %v232, %v526
    %v927 = vadd.f32 %v237, %v531
    %v928 = vadd.f32 %v242, %v536
    %v929 = vadd.f32 %v247, %v541
    %v930 = vadd.f32 %v252, %v546
    %v931 = vadd.f32 %v257, %v551
    %v932 = vadd.f32 %v262, %v556
    %v933 = vadd.f32 %v267, %v561
    %v934 = vadd.f32 %v272, %v566
    %v935 = vadd.f32 %v277, %v571
    %v936 = vadd.f32 %v282, %v576
    %v937 = vadd.f32 %v287, %v581
    %v938 = vadd.f32 %v292, %v586
    %v939 = vadd.f32 %v297, %v591
    %v940 = vadd.f32 %v302, %v596
    %v941 = vadd.f32 %v307, %v601
    %v942 = vadd.f32 %v312, %v606
    %v943 = vadd.f32 %v317, %v611
    %v944 = vadd.f32 %v322, %v616
    %v945 = vadd.f32 %v327, %v621
    %v946 = vadd.f32 %v332, %v626
    %v948 = vlaneseq
    %v949 = vshrl.u32 %v948, 7
    %v950 = vsub.s32 0, %v949
    %v951 = vrot.slane %v919, %v950
    %v953 = vadd.f32 %v922, %v951
    %v954 = vadd.f32 %v923, %v951
    %v955 = vadd.f32 %v924, %v951
    %v956 = vadd.f32 %v925, %v951
    %v957 = vadd.f32 %v926, %v951
    %v958 = vadd.f32 %v927, %v951
    %v959 = vadd.f32 %v928, %v951
    %v960 = vadd.f32 %v929, %v951
    %v961 = vadd.f32 %v930, %v951
    %v962 = vadd.f32 %v931, %v951
    %v963 = vadd.f32 %v932, %v951
    %v964 = vadd.f32 %v933, %v951
    %v965 = vadd.f32 %v934, %v951
    %v966 = vadd.f32 %v935, %v951
    %v967 = vadd.f32 %v936, %v951
    %v968 = vadd.f32 %v937, %v951
    %v969 = vadd.f32 %v938, %v951
    %v970 = vadd.f32 %v939, %v951
    %v971 = vadd.f32 %v940, %v951
    %v972 = vadd.f32 %v941, %v951
    %v973 = vadd.f32 %v942, %v951
    %v974 = vadd.f32 %v943, %v951
    %v975 = vadd.f32 %v944, %v951
    %v976 = vadd.f32 %v945, %v951
    %v977 = vadd.f32 %v946, %v951
    %v978 = vmax.f32 %v953, 0.0
    %v979 = vmax.f32 %v954, 0.0
    %v980 = vmax.f32 %v955, 0.0
    %v981 = vmax.f32 %v956, 0.0
    %v982 = vmax.f32 %v957, 0.0
    %v983 = vmax.f32 %v958, 0.0
    %v984 = vmax.f32 %v959, 0.0
    %v985 = vmax.f32 %v960, 0.0
    %v986 = vmax.f32 %v961, 0.0
    %v987 = vmax.f32 %v962, 0.0
    %v988 = vmax.f32 %v963, 0.0
    %v989 = vmax.f32 %v964, 0.0
    %v990 = vmax.f32 %v965, 0.0
    %v991 = vmax.f32 %v966, 0.0
    %v992 = vmax.f32 %v967, 0.0
    %v993 = vmax.f32 %v968, 0.0
    %v994 = vmax.f32 %v969, 0.0
    %v995 = vmax.f32 %v970, 0.0
    %v996 = vmax.f32 %v971, 0.0
    %v997 = vmax.f32 %v972, 0.0
    %v998 = vmax.f32 %v973, 0.0
    %v999 = vmax.f32 %v974, 0.0
    %v1000 = vmax.f32 %v975, 0.0
    %v1001 = vmax.f32 %v976, 0.0
    %v1002 = vmax.f32 %v977, 0.0
    %v1003 = vadd.f32 %v212, %v796
    %v1004 = vadd.f32 %v217, %v801
    %v1005 = vadd.f32 %v222, %v806
    %v1006 = vadd.f32 %v227, %v811
    %v1007 = vadd.f32 %v232, %v816
    %v1008 = vadd.f32 %v237, %v821
    %v1009 = vadd.f32 %v242, %v826
    %v1010 = vadd.f32 %v247, %v831
    %v1011 = vadd.f32 %v252, %v836
    %v1012 = vadd.f32 %v257, %v841
    %v1013 = vadd.f32 %v262, %v846
    %v1014 = vadd.f32 %v267, %v851
    %v1015 = vadd.f32 %v272, %v856
    %v1016 = vadd.f32 %v277, %v861
    %v1017 = vadd.f32 %v282, %v866
    %v1018 = vadd.f32 %v287, %v871
    %v1019 = vadd.f32 %v292, %v876
    %v1020 = vadd.f32 %v297, %v881
    %v1021 = vadd.f32 %v302, %v886
    %v1022 = vadd.f32 %v307, %v891
    %v1023 = vadd.f32 %v312, %v896
    %v1024 = vadd.f32 %v317, %v901
    %v1025 = vadd.f32 %v322, %v906
    %v1026 = vadd.f32 %v327, %v911
    %v1027 = vadd.f32 %v332, %v916
    %v1028 = vadd.f32 %v1003, %v951
    %v1029 = vadd.f32 %v1004, %v951
    %v1030 = vadd.f32 %v1005, %v951
    %v1031 = vadd.f32 %v1006, %v951
    %v1032 = vadd.f32 %v1007, %v951
    %v1033 = vadd.f32 %v1008, %v951
    %v1034 = vadd.f32 %v1009, %v951
    %v1035 = vadd.f32 %v1010, %v951
    %v1036 = vadd.f32 %v1011, %v951
    %v1037 = vadd.f32 %v1012, %v951
    %v1038 = vadd.f32 %v1013, %v951
    %v1039 = vadd.f32 %v1014, %v951
    %v1040 = vadd.f32 %v1015, %v951
    %v1041 = vadd.f32 %v1016, %v951
    %v1042 = vadd.f32 %v1017, %v951
    %v1043 = vadd.f32 %v1018, %v951
    %v1044 = vadd.f32 %v1019, %v951
    %v1045 = vadd.f32 %v1020, %v951
    %v1046 = vadd.f32 %v1021, %v951
    %v1047 = vadd.f32 %v1022, %v951
    %v1048 = vadd.f32 %v1023, %v951
    %v1049 = vadd.f32 %v1024, %v951
    %v1050 = vadd.f32 %v1025, %v951
    %v1051 = vadd.f32 %v1026, %v951
    %v1052 = vadd.f32 %v1027, %v951
    %v1053 = vmax.f32 %v1028, 0.0
    %v1054 = vmax.f32 %v1029, 0.0
    %v1055 = vmax.f32 %v1030, 0.0
    %v1056 = vmax.f32 %v1031, 0.0
    %v1057 = vmax.f32 %v1032, 0.0
    %v1058 = vmax.f32 %v1033, 0.0
    %v1059 = vmax.f32 %v1034, 0.0
    %v1060 = vmax.f32 %v1035, 0.0
    %v1061 = vmax.f32 %v1036, 0.0
    %v1062 = vmax.f32 %v1037, 0.0
    %v1063 = vmax.f32 %v1038, 0.0
    %v1064 = vmax.f32 %v1039, 0.0
    %v1065 = vmax.f32 %v1040, 0.0
    %v1066 = vmax.f32 %v1041, 0.0
    %v1067 = vmax.f32 %v1042, 0.0
    %v1068 = vmax.f32 %v1043, 0.0
    %v1069 = vmax.f32 %v1044, 0.0
    %v1070 = vmax.f32 %v1045, 0.0
    %v1071 = vmax.f32 %v1046, 0.0
    %v1072 = vmax.f32 %v1047, 0.0
    %v1073 = vmax.f32 %v1048, 0.0
    %v1074 = vmax.f32 %v1049, 0.0
    %v1075 = vmax.f32 %v1050, 0.0
    %v1076 = vmax.f32 %v1051, 0.0
    %v1077 = vmax.f32 %v1052, 0.0
    %v1079 = vlaneseq
    %v1080 = vshrl.u32 %v1079, 7
    %v1081 = vsub.s32 0, %v1080
    %v1082 = vrot.slane %v920, %v1081
    %v1084 = vmul.f32 %v978, %v1082
    %v1085 = vmul.f32 %v979, %v1082
    %v1086 = vmul.f32 %v980, %v1082
    %v1087 = vmul.f32 %v981, %v1082
    %v1088 = vmul.f32 %v982, %v1082
    %v1089 = vmul.f32 %v983, %v1082
    %v1090 = vmul.f32 %v984, %v1082
    %v1091 = vmul.f32 %v985, %v1082
    %v1092 = vmul.f32 %v986, %v1082
    %v1093 = vmul.f32 %v987, %v1082
    %v1094 = vmul.f32 %v988, %v1082
    %v1095 = vmul.f32 %v989, %v1082
    %v1096 = vmul.f32 %v990, %v1082
    %v1097 = vmul.f32 %v991, %v1082
    %v1098 = vmul.f32 %v992, %v1082
    %v1099 = vmul.f32 %v993, %v1082
    %v1100 = vmul.f32 %v994, %v1082
    %v1101 = vmul.f32 %v995, %v1082
    %v1102 = vmul.f32 %v996, %v1082
    %v1103 = vmul.f32 %v997, %v1082
    %v1104 = vmul.f32 %v998, %v1082
    %v1105 = vmul.f32 %v999, %v1082
    %v1106 = vmul.f32 %v1000, %v1082
    %v1107 = vmul.f32 %v1001, %v1082
    %v1108 = vmul.f32 %v1002, %v1082
    %vm1109 = vcmask 130048
    %v1110 = vsel %vm1109, %v1084, 0.0
    %1111 = vadd.xlane.f32.xlu0 %v1110
    %v1112 = vpop.xlane.xlu0 %1111
    %v1113 = vsel %vm1109, %v1085, 0.0
    %1114 = vadd.xlane.f32.xlu0 %v1113
    %v1115 = vpop.xlane.xlu0 %1114
    %v1116 = vsel %vm1109, %v1086, 0.0
    %1117 = vadd.xlane.f32.xlu0 %v1116
    %v1118 = vpop.xlane.xlu0 %1117
    %v1119 = vsel %vm1109, %v1087, 0.0
    %1120 = vadd.xlane.f32.xlu0 %v1119
    %v1121 = vpop.xlane.xlu0 %1120
    %v1122 = vsel %vm1109, %v1088, 0.0
    %1123 = vadd.xlane.f32.xlu0 %v1122
    %v1124 = vpop.xlane.xlu0 %1123
    %v1125 = vsel %vm1109, %v1089, 0.0
    %1126 = vadd.xlane.f32.xlu0 %v1125
    %v1127 = vpop.xlane.xlu0 %1126
    %v1128 = vsel %vm1109, %v1090, 0.0
    %1129 = vadd.xlane.f32.xlu0 %v1128
    %v1130 = vpop.xlane.xlu0 %1129
    %v1131 = vsel %vm1109, %v1091, 0.0
    %1132 = vadd.xlane.f32.xlu0 %v1131
    %v1133 = vpop.xlane.xlu0 %1132
    %v1134 = vsel %vm1109, %v1092, 0.0
    %1135 = vadd.xlane.f32.xlu0 %v1134
    %v1136 = vpop.xlane.xlu0 %1135
    %v1137 = vsel %vm1109, %v1093, 0.0
    %1138 = vadd.xlane.f32.xlu0 %v1137
    %v1139 = vpop.xlane.xlu0 %1138
    %v1140 = vsel %vm1109, %v1094, 0.0
    %1141 = vadd.xlane.f32.xlu0 %v1140
    %v1142 = vpop.xlane.xlu0 %1141
    %v1143 = vsel %vm1109, %v1095, 0.0
    %1144 = vadd.xlane.f32.xlu0 %v1143
    %v1145 = vpop.xlane.xlu0 %1144
    %v1146 = vsel %vm1109, %v1096, 0.0
    %1147 = vadd.xlane.f32.xlu0 %v1146
    %v1148 = vpop.xlane.xlu0 %1147
    %v1149 = vsel %vm1109, %v1097, 0.0
    %1150 = vadd.xlane.f32.xlu0 %v1149
    %v1151 = vpop.xlane.xlu0 %1150
    %v1152 = vsel %vm1109, %v1098, 0.0
    %1153 = vadd.xlane.f32.xlu0 %v1152
    %v1154 = vpop.xlane.xlu0 %1153
    %v1155 = vsel %vm1109, %v1099, 0.0
    %1156 = vadd.xlane.f32.xlu0 %v1155
    %v1157 = vpop.xlane.xlu0 %1156
    %v1158 = vsel %vm1109, %v1100, 0.0
    %1159 = vadd.xlane.f32.xlu0 %v1158
    %v1160 = vpop.xlane.xlu0 %1159
    %v1161 = vsel %vm1109, %v1101, 0.0
    %1162 = vadd.xlane.f32.xlu0 %v1161
    %v1163 = vpop.xlane.xlu0 %1162
    %v1164 = vsel %vm1109, %v1102, 0.0
    %1165 = vadd.xlane.f32.xlu0 %v1164
    %v1166 = vpop.xlane.xlu0 %1165
    %v1167 = vsel %vm1109, %v1103, 0.0
    %1168 = vadd.xlane.f32.xlu0 %v1167
    %v1169 = vpop.xlane.xlu0 %1168
    %v1170 = vsel %vm1109, %v1104, 0.0
    %1171 = vadd.xlane.f32.xlu0 %v1170
    %v1172 = vpop.xlane.xlu0 %1171
    %v1173 = vsel %vm1109, %v1105, 0.0
    %1174 = vadd.xlane.f32.xlu0 %v1173
    %v1175 = vpop.xlane.xlu0 %1174
    %v1176 = vsel %vm1109, %v1106, 0.0
    %1177 = vadd.xlane.f32.xlu0 %v1176
    %v1178 = vpop.xlane.xlu0 %1177
    %v1179 = vsel %vm1109, %v1107, 0.0
    %1180 = vadd.xlane.f32.xlu0 %v1179
    %v1181 = vpop.xlane.xlu0 %1180
    %v1182 = vsel %vm1109, %v1108, 0.0
    %1183 = vadd.xlane.f32.xlu0 %v1182
    %v1184 = vpop.xlane.xlu0 %1183
    %v1186 = vlaneseq
    %v1187 = vshrl.u32 %v1186, 7
    %v1188 = vsub.s32 0, %v1187
    %v1189 = vrot.slane %v921, %v1188
    %v1191 = vadd.f32 %v1112, %v1189
    %v1192 = vadd.f32 %v1115, %v1189
    %v1193 = vadd.f32 %v1118, %v1189
    %v1194 = vadd.f32 %v1121, %v1189
    %v1195 = vadd.f32 %v1124, %v1189
    %v1196 = vadd.f32 %v1127, %v1189
    %v1197 = vadd.f32 %v1130, %v1189
    %v1198 = vadd.f32 %v1133, %v1189
    %v1199 = vadd.f32 %v1136, %v1189
    %v1200 = vadd.f32 %v1139, %v1189
    %v1201 = vadd.f32 %v1142, %v1189
    %v1202 = vadd.f32 %v1145, %v1189
    %v1203 = vadd.f32 %v1148, %v1189
    %v1204 = vadd.f32 %v1151, %v1189
    %v1205 = vadd.f32 %v1154, %v1189
    %v1206 = vadd.f32 %v1157, %v1189
    %v1207 = vadd.f32 %v1160, %v1189
    %v1208 = vadd.f32 %v1163, %v1189
    %v1209 = vadd.f32 %v1166, %v1189
    %v1210 = vadd.f32 %v1169, %v1189
    %v1211 = vadd.f32 %v1172, %v1189
    %v1212 = vadd.f32 %v1175, %v1189
    %v1213 = vadd.f32 %v1178, %v1189
    %v1214 = vadd.f32 %v1181, %v1189
    %v1215 = vadd.f32 %v1184, %v1189
    %v1216 = vmul.f32 %v1053, %v1082
    %v1217 = vmul.f32 %v1054, %v1082
    %v1218 = vmul.f32 %v1055, %v1082
    %v1219 = vmul.f32 %v1056, %v1082
    %v1220 = vmul.f32 %v1057, %v1082
    %v1221 = vmul.f32 %v1058, %v1082
    %v1222 = vmul.f32 %v1059, %v1082
    %v1223 = vmul.f32 %v1060, %v1082
    %v1224 = vmul.f32 %v1061, %v1082
    %v1225 = vmul.f32 %v1062, %v1082
    %v1226 = vmul.f32 %v1063, %v1082
    %v1227 = vmul.f32 %v1064, %v1082
    %v1228 = vmul.f32 %v1065, %v1082
    %v1229 = vmul.f32 %v1066, %v1082
    %v1230 = vmul.f32 %v1067, %v1082
    %v1231 = vmul.f32 %v1068, %v1082
    %v1232 = vmul.f32 %v1069, %v1082
    %v1233 = vmul.f32 %v1070, %v1082
    %v1234 = vmul.f32 %v1071, %v1082
    %v1235 = vmul.f32 %v1072, %v1082
    %v1236 = vmul.f32 %v1073, %v1082
    %v1237 = vmul.f32 %v1074, %v1082
    %v1238 = vmul.f32 %v1075, %v1082
    %v1239 = vmul.f32 %v1076, %v1082
    %v1240 = vmul.f32 %v1077, %v1082
    %v1241 = vsel %vm1109, %v1216, 0.0
    %1242 = vadd.xlane.f32.xlu0 %v1241
    %v1243 = vpop.xlane.xlu0 %1242
    %v1244 = vsel %vm1109, %v1217, 0.0
    %1245 = vadd.xlane.f32.xlu0 %v1244
    %v1246 = vpop.xlane.xlu0 %1245
    %v1247 = vsel %vm1109, %v1218, 0.0
    %1248 = vadd.xlane.f32.xlu0 %v1247
    %v1249 = vpop.xlane.xlu0 %1248
    %v1250 = vsel %vm1109, %v1219, 0.0
    %1251 = vadd.xlane.f32.xlu0 %v1250
    %v1252 = vpop.xlane.xlu0 %1251
    %v1253 = vsel %vm1109, %v1220, 0.0
    %1254 = vadd.xlane.f32.xlu0 %v1253
    %v1255 = vpop.xlane.xlu0 %1254
    %v1256 = vsel %vm1109, %v1221, 0.0
    %1257 = vadd.xlane.f32.xlu0 %v1256
    %v1258 = vpop.xlane.xlu0 %1257
    %v1259 = vsel %vm1109, %v1222, 0.0
    %1260 = vadd.xlane.f32.xlu0 %v1259
    %v1261 = vpop.xlane.xlu0 %1260
    %v1262 = vsel %vm1109, %v1223, 0.0
    %1263 = vadd.xlane.f32.xlu0 %v1262
    %v1264 = vpop.xlane.xlu0 %1263
    %v1265 = vsel %vm1109, %v1224, 0.0
    %1266 = vadd.xlane.f32.xlu0 %v1265
    %v1267 = vpop.xlane.xlu0 %1266
    %v1268 = vsel %vm1109, %v1225, 0.0
    %1269 = vadd.xlane.f32.xlu0 %v1268
    %v1270 = vpop.xlane.xlu0 %1269
    %v1271 = vsel %vm1109, %v1226, 0.0
    %1272 = vadd.xlane.f32.xlu0 %v1271
    %v1273 = vpop.xlane.xlu0 %1272
    %v1274 = vsel %vm1109, %v1227, 0.0
    %1275 = vadd.xlane.f32.xlu0 %v1274
    %v1276 = vpop.xlane.xlu0 %1275
    %v1277 = vsel %vm1109, %v1228, 0.0
    %1278 = vadd.xlane.f32.xlu0 %v1277
    %v1279 = vpop.xlane.xlu0 %1278
    %v1280 = vsel %vm1109, %v1229, 0.0
    %1281 = vadd.xlane.f32.xlu0 %v1280
    %v1282 = vpop.xlane.xlu0 %1281
    %v1283 = vsel %vm1109, %v1230, 0.0
    %1284 = vadd.xlane.f32.xlu0 %v1283
    %v1285 = vpop.xlane.xlu0 %1284
    %v1286 = vsel %vm1109, %v1231, 0.0
    %1287 = vadd.xlane.f32.xlu0 %v1286
    %v1288 = vpop.xlane.xlu0 %1287
    %v1289 = vsel %vm1109, %v1232, 0.0
    %1290 = vadd.xlane.f32.xlu0 %v1289
    %v1291 = vpop.xlane.xlu0 %1290
    %v1292 = vsel %vm1109, %v1233, 0.0
    %1293 = vadd.xlane.f32.xlu0 %v1292
    %v1294 = vpop.xlane.xlu0 %1293
    %v1295 = vsel %vm1109, %v1234, 0.0
    %1296 = vadd.xlane.f32.xlu0 %v1295
    %v1297 = vpop.xlane.xlu0 %1296
    %v1298 = vsel %vm1109, %v1235, 0.0
    %1299 = vadd.xlane.f32.xlu0 %v1298
    %v1300 = vpop.xlane.xlu0 %1299
    %v1301 = vsel %vm1109, %v1236, 0.0
    %1302 = vadd.xlane.f32.xlu0 %v1301
    %v1303 = vpop.xlane.xlu0 %1302
    %v1304 = vsel %vm1109, %v1237, 0.0
    %1305 = vadd.xlane.f32.xlu0 %v1304
    %v1306 = vpop.xlane.xlu0 %1305
    %v1307 = vsel %vm1109, %v1238, 0.0
    %1308 = vadd.xlane.f32.xlu0 %v1307
    %v1309 = vpop.xlane.xlu0 %1308
    %v1310 = vsel %vm1109, %v1239, 0.0
    %1311 = vadd.xlane.f32.xlu0 %v1310
    %v1312 = vpop.xlane.xlu0 %1311
    %v1313 = vsel %vm1109, %v1240, 0.0
    %1314 = vadd.xlane.f32.xlu0 %v1313
    %v1315 = vpop.xlane.xlu0 %1314
    %v1316 = vadd.f32 %v1243, %v1189
    %v1317 = vadd.f32 %v1246, %v1189
    %v1318 = vadd.f32 %v1249, %v1189
    %v1319 = vadd.f32 %v1252, %v1189
    %v1320 = vadd.f32 %v1255, %v1189
    %v1321 = vadd.f32 %v1258, %v1189
    %v1322 = vadd.f32 %v1261, %v1189
    %v1323 = vadd.f32 %v1264, %v1189
    %v1324 = vadd.f32 %v1267, %v1189
    %v1325 = vadd.f32 %v1270, %v1189
    %v1326 = vadd.f32 %v1273, %v1189
    %v1327 = vadd.f32 %v1276, %v1189
    %v1328 = vadd.f32 %v1279, %v1189
    %v1329 = vadd.f32 %v1282, %v1189
    %v1330 = vadd.f32 %v1285, %v1189
    %v1331 = vadd.f32 %v1288, %v1189
    %v1332 = vadd.f32 %v1291, %v1189
    %v1333 = vadd.f32 %v1294, %v1189
    %v1334 = vadd.f32 %v1297, %v1189
    %v1335 = vadd.f32 %v1300, %v1189
    %v1336 = vadd.f32 %v1303, %v1189
    %v1337 = vadd.f32 %v1306, %v1189
    %v1338 = vadd.f32 %v1309, %v1189
    %v1339 = vadd.f32 %v1312, %v1189
    %v1340 = vadd.f32 %v1315, %v1189
    %v1341 = vxor.u32 %v1191, 2147483648
    %v1342 = vxor.u32 %v1192, 2147483648
    %v1343 = vxor.u32 %v1193, 2147483648
    %v1344 = vxor.u32 %v1194, 2147483648
    %v1345 = vxor.u32 %v1195, 2147483648
    %v1346 = vxor.u32 %v1196, 2147483648
    %v1347 = vxor.u32 %v1197, 2147483648
    %v1348 = vxor.u32 %v1198, 2147483648
    %v1349 = vxor.u32 %v1199, 2147483648
    %v1350 = vxor.u32 %v1200, 2147483648
    %v1351 = vxor.u32 %v1201, 2147483648
    %v1352 = vxor.u32 %v1202, 2147483648
    %v1353 = vxor.u32 %v1203, 2147483648
    %v1354 = vxor.u32 %v1204, 2147483648
    %v1355 = vxor.u32 %v1205, 2147483648
    %v1356 = vxor.u32 %v1206, 2147483648
    %v1357 = vxor.u32 %v1207, 2147483648
    %v1358 = vxor.u32 %v1208, 2147483648
    %v1359 = vxor.u32 %v1209, 2147483648
    %v1360 = vxor.u32 %v1210, 2147483648
    %v1361 = vxor.u32 %v1211, 2147483648
    %v1362 = vxor.u32 %v1212, 2147483648
    %v1363 = vxor.u32 %v1213, 2147483648
    %v1364 = vxor.u32 %v1214, 2147483648
    %v1365 = vxor.u32 %v1215, 2147483648
    %v1366 = vmul.f32 %v1341, 1.442695
    %v1367 = vpow.pop %v1366
    %v1368 = vmul.f32 %v1342, 1.442695
    %v1369 = vpow.pop %v1368
    %v1370 = vmul.f32 %v1343, 1.442695
    %v1371 = vpow.pop %v1370
    %v1372 = vmul.f32 %v1344, 1.442695
    %v1373 = vpow.pop %v1372
    %v1374 = vmul.f32 %v1345, 1.442695
    %v1375 = vpow.pop %v1374
    %v1376 = vmul.f32 %v1346, 1.442695
    %v1377 = vpow.pop %v1376
    %v1378 = vmul.f32 %v1347, 1.442695
    %v1379 = vpow.pop %v1378
    %v1380 = vmul.f32 %v1348, 1.442695
    %v1381 = vpow.pop %v1380
    %v1382 = vmul.f32 %v1349, 1.442695
    %v1383 = vpow.pop %v1382
    %v1384 = vmul.f32 %v1350, 1.442695
    %v1385 = vpow.pop %v1384
    %v1386 = vmul.f32 %v1351, 1.442695
    %v1387 = vpow.pop %v1386
    %v1388 = vmul.f32 %v1352, 1.442695
    %v1389 = vpow.pop %v1388
    %v1390 = vmul.f32 %v1353, 1.442695
    %v1391 = vpow.pop %v1390
    %v1392 = vmul.f32 %v1354, 1.442695
    %v1393 = vpow.pop %v1392
    %v1394 = vmul.f32 %v1355, 1.442695
    %v1395 = vpow.pop %v1394
    %v1396 = vmul.f32 %v1356, 1.442695
    %v1397 = vpow.pop %v1396
    %v1398 = vmul.f32 %v1357, 1.442695
    %v1399 = vpow.pop %v1398
    %v1400 = vmul.f32 %v1358, 1.442695
    %v1401 = vpow.pop %v1400
    %v1402 = vmul.f32 %v1359, 1.442695
    %v1403 = vpow.pop %v1402
    %v1404 = vmul.f32 %v1360, 1.442695
    %v1405 = vpow.pop %v1404
    %v1406 = vmul.f32 %v1361, 1.442695
    %v1407 = vpow.pop %v1406
    %v1408 = vmul.f32 %v1362, 1.442695
    %v1409 = vpow.pop %v1408
    %v1410 = vmul.f32 %v1363, 1.442695
    %v1411 = vpow.pop %v1410
    %v1412 = vmul.f32 %v1364, 1.442695
    %v1413 = vpow.pop %v1412
    %v1414 = vmul.f32 %v1365, 1.442695
    %v1415 = vpow.pop %v1414
    %v1416 = vadd.f32 %v1367, 1.0
    %v1417 = vadd.f32 %v1369, 1.0
    %v1418 = vadd.f32 %v1371, 1.0
    %v1419 = vadd.f32 %v1373, 1.0
    %v1420 = vadd.f32 %v1375, 1.0
    %v1421 = vadd.f32 %v1377, 1.0
    %v1422 = vadd.f32 %v1379, 1.0
    %v1423 = vadd.f32 %v1381, 1.0
    %v1424 = vadd.f32 %v1383, 1.0
    %v1425 = vadd.f32 %v1385, 1.0
    %v1426 = vadd.f32 %v1387, 1.0
    %v1427 = vadd.f32 %v1389, 1.0
    %v1428 = vadd.f32 %v1391, 1.0
    %v1429 = vadd.f32 %v1393, 1.0
    %v1430 = vadd.f32 %v1395, 1.0
    %v1431 = vadd.f32 %v1397, 1.0
    %v1432 = vadd.f32 %v1399, 1.0
    %v1433 = vadd.f32 %v1401, 1.0
    %v1434 = vadd.f32 %v1403, 1.0
    %v1435 = vadd.f32 %v1405, 1.0
    %v1436 = vadd.f32 %v1407, 1.0
    %v1437 = vadd.f32 %v1409, 1.0
    %v1438 = vadd.f32 %v1411, 1.0
    %v1439 = vadd.f32 %v1413, 1.0
    %v1440 = vadd.f32 %v1415, 1.0
    %v1441 = vrcp.pop %v1416
    %v1442 = vmul.f32 1.0, %v1441
    %v1443 = vrcp.pop %v1417
    %v1444 = vmul.f32 1.0, %v1443
    %v1445 = vrcp.pop %v1418
    %v1446 = vmul.f32 1.0, %v1445
    %v1447 = vrcp.pop %v1419
    %v1448 = vmul.f32 1.0, %v1447
    %v1449 = vrcp.pop %v1420
    %v1450 = vmul.f32 1.0, %v1449
    %v1451 = vrcp.pop %v1421
    %v1452 = vmul.f32 1.0, %v1451
    %v1453 = vrcp.pop %v1422
    %v1454 = vmul.f32 1.0, %v1453
    %v1455 = vrcp.pop %v1423
    %v1456 = vmul.f32 1.0, %v1455
    %v1457 = vrcp.pop %v1424
    %v1458 = vmul.f32 1.0, %v1457
    %v1459 = vrcp.pop %v1425
    %v1460 = vmul.f32 1.0, %v1459
    %v1461 = vrcp.pop %v1426
    %v1462 = vmul.f32 1.0, %v1461
    %v1463 = vrcp.pop %v1427
    %v1464 = vmul.f32 1.0, %v1463
    %v1465 = vrcp.pop %v1428
    %v1466 = vmul.f32 1.0, %v1465
    %v1467 = vrcp.pop %v1429
    %v1468 = vmul.f32 1.0, %v1467
    %v1469 = vrcp.pop %v1430
    %v1470 = vmul.f32 1.0, %v1469
    %v1471 = vrcp.pop %v1431
    %v1472 = vmul.f32 1.0, %v1471
    %v1473 = vrcp.pop %v1432
    %v1474 = vmul.f32 1.0, %v1473
    %v1475 = vrcp.pop %v1433
    %v1476 = vmul.f32 1.0, %v1475
    %v1477 = vrcp.pop %v1434
    %v1478 = vmul.f32 1.0, %v1477
    %v1479 = vrcp.pop %v1435
    %v1480 = vmul.f32 1.0, %v1479
    %v1481 = vrcp.pop %v1436
    %v1482 = vmul.f32 1.0, %v1481
    %v1483 = vrcp.pop %v1437
    %v1484 = vmul.f32 1.0, %v1483
    %v1485 = vrcp.pop %v1438
    %v1486 = vmul.f32 1.0, %v1485
    %v1487 = vrcp.pop %v1439
    %v1488 = vmul.f32 1.0, %v1487
    %v1489 = vrcp.pop %v1440
    %v1490 = vmul.f32 1.0, %v1489
    %v1491 = vxor.u32 %v1316, 2147483648
    %v1492 = vxor.u32 %v1317, 2147483648
    %v1493 = vxor.u32 %v1318, 2147483648
    %v1494 = vxor.u32 %v1319, 2147483648
    %v1495 = vxor.u32 %v1320, 2147483648
    %v1496 = vxor.u32 %v1321, 2147483648
    %v1497 = vxor.u32 %v1322, 2147483648
    %v1498 = vxor.u32 %v1323, 2147483648
    %v1499 = vxor.u32 %v1324, 2147483648
    %v1500 = vxor.u32 %v1325, 2147483648
    %v1501 = vxor.u32 %v1326, 2147483648
    %v1502 = vxor.u32 %v1327, 2147483648
    %v1503 = vxor.u32 %v1328, 2147483648
    %v1504 = vxor.u32 %v1329, 2147483648
    %v1505 = vxor.u32 %v1330, 2147483648
    %v1506 = vxor.u32 %v1331, 2147483648
    %v1507 = vxor.u32 %v1332, 2147483648
    %v1508 = vxor.u32 %v1333, 2147483648
    %v1509 = vxor.u32 %v1334, 2147483648
    %v1510 = vxor.u32 %v1335, 2147483648
    %v1511 = vxor.u32 %v1336, 2147483648
    %v1512 = vxor.u32 %v1337, 2147483648
    %v1513 = vxor.u32 %v1338, 2147483648
    %v1514 = vxor.u32 %v1339, 2147483648
    %v1515 = vxor.u32 %v1340, 2147483648
    %v1516 = vmul.f32 %v1491, 1.442695
    %v1517 = vpow.pop %v1516
    %v1518 = vmul.f32 %v1492, 1.442695
    %v1519 = vpow.pop %v1518
    %v1520 = vmul.f32 %v1493, 1.442695
    %v1521 = vpow.pop %v1520
    %v1522 = vmul.f32 %v1494, 1.442695
    %v1523 = vpow.pop %v1522
    %v1524 = vmul.f32 %v1495, 1.442695
    %v1525 = vpow.pop %v1524
    %v1526 = vmul.f32 %v1496, 1.442695
    %v1527 = vpow.pop %v1526
    %v1528 = vmul.f32 %v1497, 1.442695
    %v1529 = vpow.pop %v1528
    %v1530 = vmul.f32 %v1498, 1.442695
    %v1531 = vpow.pop %v1530
    %v1532 = vmul.f32 %v1499, 1.442695
    %v1533 = vpow.pop %v1532
    %v1534 = vmul.f32 %v1500, 1.442695
    %v1535 = vpow.pop %v1534
    %v1536 = vmul.f32 %v1501, 1.442695
    %v1537 = vpow.pop %v1536
    %v1538 = vmul.f32 %v1502, 1.442695
    %v1539 = vpow.pop %v1538
    %v1540 = vmul.f32 %v1503, 1.442695
    %v1541 = vpow.pop %v1540
    %v1542 = vmul.f32 %v1504, 1.442695
    %v1543 = vpow.pop %v1542
    %v1544 = vmul.f32 %v1505, 1.442695
    %v1545 = vpow.pop %v1544
    %v1546 = vmul.f32 %v1506, 1.442695
    %v1547 = vpow.pop %v1546
    %v1548 = vmul.f32 %v1507, 1.442695
    %v1549 = vpow.pop %v1548
    %v1550 = vmul.f32 %v1508, 1.442695
    %v1551 = vpow.pop %v1550
    %v1552 = vmul.f32 %v1509, 1.442695
    %v1553 = vpow.pop %v1552
    %v1554 = vmul.f32 %v1510, 1.442695
    %v1555 = vpow.pop %v1554
    %v1556 = vmul.f32 %v1511, 1.442695
    %v1557 = vpow.pop %v1556
    %v1558 = vmul.f32 %v1512, 1.442695
    %v1559 = vpow.pop %v1558
    %v1560 = vmul.f32 %v1513, 1.442695
    %v1561 = vpow.pop %v1560
    %v1562 = vmul.f32 %v1514, 1.442695
    %v1563 = vpow.pop %v1562
    %v1564 = vmul.f32 %v1515, 1.442695
    %v1565 = vpow.pop %v1564
    %v1566 = vadd.f32 %v1517, 1.0
    %v1567 = vadd.f32 %v1519, 1.0
    %v1568 = vadd.f32 %v1521, 1.0
    %v1569 = vadd.f32 %v1523, 1.0
    %v1570 = vadd.f32 %v1525, 1.0
    %v1571 = vadd.f32 %v1527, 1.0
    %v1572 = vadd.f32 %v1529, 1.0
    %v1573 = vadd.f32 %v1531, 1.0
    %v1574 = vadd.f32 %v1533, 1.0
    %v1575 = vadd.f32 %v1535, 1.0
    %v1576 = vadd.f32 %v1537, 1.0
    %v1577 = vadd.f32 %v1539, 1.0
    %v1578 = vadd.f32 %v1541, 1.0
    %v1579 = vadd.f32 %v1543, 1.0
    %v1580 = vadd.f32 %v1545, 1.0
    %v1581 = vadd.f32 %v1547, 1.0
    %v1582 = vadd.f32 %v1549, 1.0
    %v1583 = vadd.f32 %v1551, 1.0
    %v1584 = vadd.f32 %v1553, 1.0
    %v1585 = vadd.f32 %v1555, 1.0
    %v1586 = vadd.f32 %v1557, 1.0
    %v1587 = vadd.f32 %v1559, 1.0
    %v1588 = vadd.f32 %v1561, 1.0
    %v1589 = vadd.f32 %v1563, 1.0
    %v1590 = vadd.f32 %v1565, 1.0
    %v1591 = vrcp.pop %v1566
    %v1592 = vmul.f32 1.0, %v1591
    %v1593 = vrcp.pop %v1567
    %v1594 = vmul.f32 1.0, %v1593
    %v1595 = vrcp.pop %v1568
    %v1596 = vmul.f32 1.0, %v1595
    %v1597 = vrcp.pop %v1569
    %v1598 = vmul.f32 1.0, %v1597
    %v1599 = vrcp.pop %v1570
    %v1600 = vmul.f32 1.0, %v1599
    %v1601 = vrcp.pop %v1571
    %v1602 = vmul.f32 1.0, %v1601
    %v1603 = vrcp.pop %v1572
    %v1604 = vmul.f32 1.0, %v1603
    %v1605 = vrcp.pop %v1573
    %v1606 = vmul.f32 1.0, %v1605
    %v1607 = vrcp.pop %v1574
    %v1608 = vmul.f32 1.0, %v1607
    %v1609 = vrcp.pop %v1575
    %v1610 = vmul.f32 1.0, %v1609
    %v1611 = vrcp.pop %v1576
    %v1612 = vmul.f32 1.0, %v1611
    %v1613 = vrcp.pop %v1577
    %v1614 = vmul.f32 1.0, %v1613
    %v1615 = vrcp.pop %v1578
    %v1616 = vmul.f32 1.0, %v1615
    %v1617 = vrcp.pop %v1579
    %v1618 = vmul.f32 1.0, %v1617
    %v1619 = vrcp.pop %v1580
    %v1620 = vmul.f32 1.0, %v1619
    %v1621 = vrcp.pop %v1581
    %v1622 = vmul.f32 1.0, %v1621
    %v1623 = vrcp.pop %v1582
    %v1624 = vmul.f32 1.0, %v1623
    %v1625 = vrcp.pop %v1583
    %v1626 = vmul.f32 1.0, %v1625
    %v1627 = vrcp.pop %v1584
    %v1628 = vmul.f32 1.0, %v1627
    %v1629 = vrcp.pop %v1585
    %v1630 = vmul.f32 1.0, %v1629
    %v1631 = vrcp.pop %v1586
    %v1632 = vmul.f32 1.0, %v1631
    %v1633 = vrcp.pop %v1587
    %v1634 = vmul.f32 1.0, %v1633
    %v1635 = vrcp.pop %v1588
    %v1636 = vmul.f32 1.0, %v1635
    %v1637 = vrcp.pop %v1589
    %v1638 = vmul.f32 1.0, %v1637
    %v1639 = vrcp.pop %v1590
    %v1640 = vmul.f32 1.0, %v1639
    %v1641 = vsub.f32 %v1442, %v1592
    %v1642 = vsub.f32 %v1444, %v1594
    %v1643 = vsub.f32 %v1446, %v1596
    %v1644 = vsub.f32 %v1448, %v1598
    %v1645 = vsub.f32 %v1450, %v1600
    %v1646 = vsub.f32 %v1452, %v1602
    %v1647 = vsub.f32 %v1454, %v1604
    %v1648 = vsub.f32 %v1456, %v1606
    %v1649 = vsub.f32 %v1458, %v1608
    %v1650 = vsub.f32 %v1460, %v1610
    %v1651 = vsub.f32 %v1462, %v1612
    %v1652 = vsub.f32 %v1464, %v1614
    %v1653 = vsub.f32 %v1466, %v1616
    %v1654 = vsub.f32 %v1468, %v1618
    %v1655 = vsub.f32 %v1470, %v1620
    %v1656 = vsub.f32 %v1472, %v1622
    %v1657 = vsub.f32 %v1474, %v1624
    %v1658 = vsub.f32 %v1476, %v1626
    %v1659 = vsub.f32 %v1478, %v1628
    %v1660 = vsub.f32 %v1480, %v1630
    %v1661 = vsub.f32 %v1482, %v1632
    %v1662 = vsub.f32 %v1484, %v1634
    %v1663 = vsub.f32 %v1486, %v1636
    %v1664 = vsub.f32 %v1488, %v1638
    %v1665 = vsub.f32 %v1490, %v1640
    %v1666 = vmin.f32 %v1641, 0.0
    %v1667 = vmin.f32 %v1642, 0.0
    %v1668 = vmin.f32 %v1643, 0.0
    %v1669 = vmin.f32 %v1644, 0.0
    %v1670 = vmin.f32 %v1645, 0.0
    %v1671 = vmin.f32 %v1646, 0.0
    %v1672 = vmin.f32 %v1647, 0.0
    %v1673 = vmin.f32 %v1648, 0.0
    %v1674 = vmin.f32 %v1649, 0.0
    %v1675 = vmin.f32 %v1650, 0.0
    %v1676 = vmin.f32 %v1651, 0.0
    %v1677 = vmin.f32 %v1652, 0.0
    %v1678 = vmin.f32 %v1653, 0.0
    %v1679 = vmin.f32 %v1654, 0.0
    %v1680 = vmin.f32 %v1655, 0.0
    %v1681 = vmin.f32 %v1656, 0.0
    %v1682 = vmin.f32 %v1657, 0.0
    %v1683 = vmin.f32 %v1658, 0.0
    %v1684 = vmin.f32 %v1659, 0.0
    %v1685 = vmin.f32 %v1660, 0.0
    %v1686 = vmin.f32 %v1661, 0.0
    %v1687 = vmin.f32 %v1662, 0.0
    %v1688 = vmin.f32 %v1663, 0.0
    %v1689 = vmin.f32 %v1664, 0.0
    %v1690 = vmin.f32 %v1665, 0.0
    %s1691 = sld [smem:[#allocation2]]
    %vm1692 = vcmask 7168
    %v1693 = vsel %vm1692, %v1641, 0.0
    %v1694 = vsel %vm1692, %v1642, 0.0
    %v1695 = vadd.f32 %v1693, %v1694
    %v1696 = vsel %vm1692, %v1643, 0.0
    %v1697 = vadd.f32 %v1695, %v1696
    %v1698 = vsel %vm1692, %v1644, 0.0
    %v1699 = vadd.f32 %v1697, %v1698
    %v1700 = vsel %vm1692, %v1645, 0.0
    %v1701 = vadd.f32 %v1699, %v1700
    %v1702 = vsel %vm1692, %v1646, 0.0
    %v1703 = vadd.f32 %v1701, %v1702
    %v1704 = vsel %vm1692, %v1647, 0.0
    %v1705 = vadd.f32 %v1703, %v1704
    %v1706 = vsel %vm1692, %v1648, 0.0
    %v1707 = vadd.f32 %v1705, %v1706
    %v1708 = vsel %vm1692, %v1649, 0.0
    %v1709 = vadd.f32 %v1707, %v1708
    %v1710 = vsel %vm1692, %v1650, 0.0
    %v1711 = vadd.f32 %v1709, %v1710
    %v1712 = vsel %vm1692, %v1651, 0.0
    %v1713 = vadd.f32 %v1711, %v1712
    %v1714 = vsel %vm1692, %v1652, 0.0
    %v1715 = vadd.f32 %v1713, %v1714
    %v1716 = vsel %vm1692, %v1653, 0.0
    %v1717 = vadd.f32 %v1715, %v1716
    %v1718 = vsel %vm1692, %v1654, 0.0
    %v1719 = vadd.f32 %v1717, %v1718
    %v1720 = vsel %vm1692, %v1655, 0.0
    %v1721 = vadd.f32 %v1719, %v1720
    %v1722 = vsel %vm1692, %v1656, 0.0
    %v1723 = vadd.f32 %v1721, %v1722
    %v1724 = vsel %vm1692, %v1657, 0.0
    %v1725 = vadd.f32 %v1723, %v1724
    %v1726 = vsel %vm1692, %v1658, 0.0
    %v1727 = vadd.f32 %v1725, %v1726
    %v1728 = vsel %vm1692, %v1659, 0.0
    %v1729 = vadd.f32 %v1727, %v1728
    %v1730 = vsel %vm1692, %v1660, 0.0
    %v1731 = vadd.f32 %v1729, %v1730
    %v1732 = vsel %vm1692, %v1661, 0.0
    %v1733 = vadd.f32 %v1731, %v1732
    %v1734 = vsel %vm1692, %v1662, 0.0
    %v1735 = vadd.f32 %v1733, %v1734
    %v1736 = vsel %vm1692, %v1663, 0.0
    %v1737 = vadd.f32 %v1735, %v1736
    %v1738 = vsel %vm1692, %v1664, 0.0
    %v1739 = vadd.f32 %v1737, %v1738
    %v1740 = vsel %vm1692, %v1665, 0.0
    %v1741 = vadd.f32 %v1739, %v1740
    %1742 = vadd.xlane.f32.xlu0 %v1741
    %v1743 = vpop.xlane.xlu0 %1742
    %v1744 = vrot.slane %v1743, 4
    %v1745 = vadd.f32 %v1743, %v1744
    %v1746 = vrot.slane %v1745, 2
    %v1747 = vadd.f32 %v1745, %v1746
    %v1748 = vrot.slane %v1747, 1
    %v1749 = vadd.f32 %v1747, %v1748
    %s1750 = vtos %v1749
    %s1751 = sadd.f32 %s1691, %s1750
    %s1752 = scalar_lea.smem [#allocation2], 0
    %1753 = sst [smem:[%s1752]] %s1751
    %s1754 = sld [smem:[#allocation2 + $0x1]]
    %v1755 = vmul.f32 %v1666, %v1666
    %v1756 = vmul.f32 %v1667, %v1667
    %v1757 = vmul.f32 %v1668, %v1668
    %v1758 = vmul.f32 %v1669, %v1669
    %v1759 = vmul.f32 %v1670, %v1670
    %v1760 = vmul.f32 %v1671, %v1671
    %v1761 = vmul.f32 %v1672, %v1672
    %v1762 = vmul.f32 %v1673, %v1673
    %v1763 = vmul.f32 %v1674, %v1674
    %v1764 = vmul.f32 %v1675, %v1675
    %v1765 = vmul.f32 %v1676, %v1676
    %v1766 = vmul.f32 %v1677, %v1677
    %v1767 = vmul.f32 %v1678, %v1678
    %v1768 = vmul.f32 %v1679, %v1679
    %v1769 = vmul.f32 %v1680, %v1680
    %v1770 = vmul.f32 %v1681, %v1681
    %v1771 = vmul.f32 %v1682, %v1682
    %v1772 = vmul.f32 %v1683, %v1683
    %v1773 = vmul.f32 %v1684, %v1684
    %v1774 = vmul.f32 %v1685, %v1685
    %v1775 = vmul.f32 %v1686, %v1686
    %v1776 = vmul.f32 %v1687, %v1687
    %v1777 = vmul.f32 %v1688, %v1688
    %v1778 = vmul.f32 %v1689, %v1689
    %v1779 = vmul.f32 %v1690, %v1690
    %v1780 = vsel %vm1692, %v1755, 0.0
    %v1781 = vsel %vm1692, %v1756, 0.0
    %v1782 = vadd.f32 %v1780, %v1781
    %v1783 = vsel %vm1692, %v1757, 0.0
    %v1784 = vadd.f32 %v1782, %v1783
    %v1785 = vsel %vm1692, %v1758, 0.0
    %v1786 = vadd.f32 %v1784, %v1785
    %v1787 = vsel %vm1692, %v1759, 0.0
    %v1788 = vadd.f32 %v1786, %v1787
    %v1789 = vsel %vm1692, %v1760, 0.0
    %v1790 = vadd.f32 %v1788, %v1789
    %v1791 = vsel %vm1692, %v1761, 0.0
    %v1792 = vadd.f32 %v1790, %v1791
    %v1793 = vsel %vm1692, %v1762, 0.0
    %v1794 = vadd.f32 %v1792, %v1793
    %v1795 = vsel %vm1692, %v1763, 0.0
    %v1796 = vadd.f32 %v1794, %v1795
    %v1797 = vsel %vm1692, %v1764, 0.0
    %v1798 = vadd.f32 %v1796, %v1797
    %v1799 = vsel %vm1692, %v1765, 0.0
    %v1800 = vadd.f32 %v1798, %v1799
    %v1801 = vsel %vm1692, %v1766, 0.0
    %v1802 = vadd.f32 %v1800, %v1801
    %v1803 = vsel %vm1692, %v1767, 0.0
    %v1804 = vadd.f32 %v1802, %v1803
    %v1805 = vsel %vm1692, %v1768, 0.0
    %v1806 = vadd.f32 %v1804, %v1805
    %v1807 = vsel %vm1692, %v1769, 0.0
    %v1808 = vadd.f32 %v1806, %v1807
    %v1809 = vsel %vm1692, %v1770, 0.0
    %v1810 = vadd.f32 %v1808, %v1809
    %v1811 = vsel %vm1692, %v1771, 0.0
    %v1812 = vadd.f32 %v1810, %v1811
    %v1813 = vsel %vm1692, %v1772, 0.0
    %v1814 = vadd.f32 %v1812, %v1813
    %v1815 = vsel %vm1692, %v1773, 0.0
    %v1816 = vadd.f32 %v1814, %v1815
    %v1817 = vsel %vm1692, %v1774, 0.0
    %v1818 = vadd.f32 %v1816, %v1817
    %v1819 = vsel %vm1692, %v1775, 0.0
    %v1820 = vadd.f32 %v1818, %v1819
    %v1821 = vsel %vm1692, %v1776, 0.0
    %v1822 = vadd.f32 %v1820, %v1821
    %v1823 = vsel %vm1692, %v1777, 0.0
    %v1824 = vadd.f32 %v1822, %v1823
    %v1825 = vsel %vm1692, %v1778, 0.0
    %v1826 = vadd.f32 %v1824, %v1825
    %v1827 = vsel %vm1692, %v1779, 0.0
    %v1828 = vadd.f32 %v1826, %v1827
    %1829 = vadd.xlane.f32.xlu0 %v1828
    %v1830 = vpop.xlane.xlu0 %1829
    %v1831 = vrot.slane %v1830, 4
    %v1832 = vadd.f32 %v1830, %v1831
    %v1833 = vrot.slane %v1832, 2
    %v1834 = vadd.f32 %v1832, %v1833
    %v1835 = vrot.slane %v1834, 1
    %v1836 = vadd.f32 %v1834, %v1835
    %s1837 = vtos %v1836
    %s1838 = sadd.f32 %s1754, %s1837
    %s1839 = scalar_lea.smem [#allocation2], 1
    %1840 = sst [smem:[%s1839]] %s1838
    // Predicated region
    $region38: #{tpu_custom_call.1} parent=1 // pred_check
      %p1841 = pneg %p32
    $region39: #{tpu_custom_call.1} parent=1 // pred_check_branch
      %1843 = sbr.rel (%p1841) target = $region41
    $region40: #{tpu_custom_call.1} parent=1 // pred_region
      %s1844 = sld [smem:[#allocation2]]
      %s1845 = sld [smem:[#allocation2 + $0x1]]
      %s1846 = sadd.f32 %s1844, %s1845
      %s1847 = smul.f32 %s1846, 0.005
      %s1848 = scalar_lea.smem [#allocation4], 0
      %1849 = sst [smem:[%s1848]] %s1847
    $region41: #{tpu_custom_call.1} parent=1 // pred_fallthru
      _
    // Predicated region
    $region42: #{tpu_custom_call.1} parent=1 // pred_check
      _
    $region43: #{tpu_custom_call.1} parent=1 // pred_check_branch
      %1851 = sbr.rel (0) target = $region45
    $region44: #{tpu_custom_call.1} parent=1 // pred_region
      %s1853 = ssub.s32 16, 16
      %1854 = vsyncadd [#allocation5], %s1853
      %1857 = dma.smem_to_hbm [#allocation4], 16, %s8, [#allocation5]
    $region45: #{tpu_custom_call.1} parent=1 // pred_fallthru
      _
    // Predicated region
    $region46: #{tpu_custom_call.1} parent=1 // pred_check
      _
    $region47: #{tpu_custom_call.1} parent=1 // pred_check_branch
      %1859 = sbr.rel (0) target = $region49
    $region48: #{tpu_custom_call.1} parent=1 // pred_region
      %1860 = dma.done [#allocation5], 16
    $region49: #{tpu_custom_call.1} parent=1 // pred_fallthru
      _
    %1861 = sfence
    %1862 = vsyncpa [#allocation5], 1

</llo_original>
